<compile_context>
chip_gen: v5e
topology: v5e:2x2
jax: 0.10.0
libtpu: 0.0.40
codegen_flags: <defaults>
</compile_context>

<pallas_src>
import jax
import jax.numpy as jnp
from jax import lax
from jax.experimental import pallas as pl
from jax.experimental.pallas import tpu as pltpu

# ----------------------------- model dimensions -----------------------------
BATCH = 4                            # number of prompts processed per call
NUM_AGENTS = 2                       # config.data.num_agents
IMG_C, IMG_H, IMG_W = 3, 32, 32      # small synthetic agent views
PATCH = 8
N_PATCH = (IMG_H // PATCH) * (IMG_W // PATCH)      # 16 patches per image
IMG_TOKENS = NUM_AGENTS * N_PATCH                  # 32 image tokens
PATCH_DIM = IMG_C * PATCH * PATCH                  # 192 (no per-call padding)
VISION_DIM = 128                     # vision tower width
HIDDEN = 128                         # language model width
VIS_FUSED = VISION_DIM + HIDDEN      # fused vision/projector output width
MLP_DIM = 256
VOCAB = 256
TEXT_LEN = 8                         # tokenized prompt length (synthetic)
SEQ = IMG_TOKENS + TEXT_LEN          # 40 total tokens
DTYPE = jnp.float32                  # residual / elementwise dtype
MXU_DTYPE = jnp.bfloat16             # matmul operand dtype (native MXU path)

ATTN_SCALE = 1.0 / (HIDDEN ** 0.5)
NEG_INF = -1e30


# --------------------------------- kernel ------------------------------------
def _rms(v, eps=1e-6):
    # norm gains are folded into the following weight matrices at pack time
    return v * lax.rsqrt(jnp.mean(v * v, axis=-1, keepdims=True) + eps)


def _fused_forward_kernel(
        patches_ref, ids_ref,                               # per-sequence inputs
        vis_w_ref, vis_b_ref,                               # fused vision+projector
        tok_emb_ref,                                        # text embedding table
        wqkv_ref, wo_ref,                                   # attention weights
        w_up_ref, b_up_ref, w_dn_ref, b_dn_ref,             # MLP weights
        head_w_ref, mask_ref,                               # LM head + causal mask
        img_hid_ref, h0_ref, h1_ref, logits_ref):           # outputs (VMEM)
    # ---- 1+2. fused vision tower + multimodal projector: one wide MXU matmul
    vis = jnp.dot(patches_ref[...], vis_w_ref[...],
                  preferred_element_type=jnp.float32) + vis_b_ref[...]
    img_hid = vis[:, 0:VISION_DIM]                # vision-tower hidden states
    img_tok = vis[:, VISION_DIM:VIS_FUSED]        # projected image tokens
    img_hid_ref[...] = img_hid.astype(img_hid_ref.dtype)

    # ---- 3. text token embedding: one-hot(ids) @ tok_emb (single MXU pass,
    #         replaces the 8-step serialized scalar gather).  Out-of-range ids
    #         produce an all-zero row instead of an OOB VMEM read.
    ids = ids_ref[...]                                        # (TEXT_LEN, 1) i32
    onehot = (lax.broadcasted_iota(jnp.int32, (TEXT_LEN, VOCAB), 1)
              == ids).astype(jnp.float32)                     # (TEXT_LEN, VOCAB)
    txt_tok = jnp.dot(onehot, tok_emb_ref[...],
                      preferred_element_type=jnp.float32)     # exact row gather

    # ---- 4. merge image + text tokens in vregs; h0 written exactly once.
    x = jnp.concatenate([img_tok, txt_tok], axis=0)           # (SEQ, HIDDEN) f32
    h0_ref[...] = x.astype(h0_ref.dtype)

    # ---- 5. fused pre-norm decoder block (causal over the merged sequence).
    #         ln1 gain and 1/sqrt(d) are pre-folded into wqkv.
    hn = _rms(x)
    qkv = jnp.dot(hn.astype(MXU_DTYPE), wqkv_ref[...],
                  preferred_element_type=jnp.float32)         # (SEQ, 3*HIDDEN)
    q = qkv[:, 0:HIDDEN]
    k = qkv[:, HIDDEN:2 * HIDDEN]
    v = qkv[:, 2 * HIDDEN:3 * HIDDEN]
    scores = lax.dot_general(q.astype(MXU_DTYPE), k.astype(MXU_DTYPE),
                             (((1,), (1,)), ((), ())),        # q @ k.T
                             preferred_element_type=jnp.float32)
    scores = scores + mask_ref[...]                           # additive causal mask
    scores = scores - jnp.max(scores, axis=-1, keepdims=True)
    p = jnp.exp(scores)
    p = p * pl.reciprocal(jnp.sum(p, axis=-1, keepdims=True), approx=True)
    ctx = jnp.dot(p.astype(MXU_DTYPE), v.astype(MXU_DTYPE),
                  preferred_element_type=jnp.float32)
    attn_out = jnp.dot(ctx.astype(MXU_DTYPE), wo_ref[...],
                       preferred_element_type=jnp.float32)
    x = x + attn_out

    h2 = _rms(x)                                              # ln2 gain folded into w_up
    up = jnp.dot(h2.astype(MXU_DTYPE), w_up_ref[...],
                 preferred_element_type=jnp.float32) + b_up_ref[...]
    up = jax.nn.gelu(up, approximate=True)    # tanh approx (EUP); exact erf not needed
    dn = jnp.dot(up.astype(MXU_DTYPE), w_dn_ref[...],
                 preferred_element_type=jnp.float32) + b_dn_ref[...]
    x = x + dn
    h1_ref[...] = x.astype(h1_ref.dtype)

    # ---- 6. final RMSNorm (gain folded into head_w) + LM head -> logits
    xf = _rms(x)
    logits_ref[...] = jnp.dot(xf.astype(MXU_DTYPE), head_w_ref[...],
                              preferred_element_type=jnp.float32
                              ).astype(logits_ref.dtype)


# --------------------------------- parameters --------------------------------
def init_params(key):
    ks = jax.random.split(key, 12)
    n = lambda k, shape, scale: (scale * jax.random.normal(k, shape)).astype(DTYPE)
    return {
        "patch_w": n(ks[0], (PATCH_DIM, VISION_DIM), 0.02),
        "patch_b": jnp.zeros((VISION_DIM,), DTYPE),
        "proj_w": n(ks[1], (VISION_DIM, HIDDEN), 0.02),
        "proj_b": jnp.zeros((HIDDEN,), DTYPE),
        "tok_emb": n(ks[2], (VOCAB, HIDDEN), 0.02),
        "block": {
            "ln1_g": jnp.ones((HIDDEN,), DTYPE),
            "wq": n(ks[3], (HIDDEN, HIDDEN), 0.02),
            "wk": n(ks[4], (HIDDEN, HIDDEN), 0.02),
            "wv": n(ks[5], (HIDDEN, HIDDEN), 0.02),
            "wo": n(ks[6], (HIDDEN, HIDDEN), 0.02),
            "ln2_g": jnp.ones((HIDDEN,), DTYPE),
            "w_up": n(ks[7], (HIDDEN, MLP_DIM), 0.02),
            "b_up": jnp.zeros((MLP_DIM,), DTYPE),
            "w_dn": n(ks[8], (MLP_DIM, HIDDEN), 0.02),
            "b_dn": jnp.zeros((HIDDEN,), DTYPE),
        },
        "lnf_g": jnp.ones((HIDDEN,), DTYPE),
        "head_w": n(ks[9], (HIDDEN, VOCAB), 0.02),
    }


def pack_params(p):
    """One-time packing:
      * fuse patch-embed + projector: W = [patch_w | patch_w @ proj_w],
        b = [patch_b | patch_b @ proj_w + proj_b]
      * fuse Wq/Wk/Wv -> (HIDDEN, 3*HIDDEN); fold 1/sqrt(d) into the q columns
      * fold ln1_g into wqkv rows, ln2_g into w_up rows, lnf_g into head_w rows
      * precompute the additive causal mask
      * cast all MXU weight operands to bf16 (biases / embedding table stay f32)
    """
    blk = p["block"]
    vis_w = jnp.concatenate(
        [p["patch_w"], p["patch_w"] @ p["proj_w"]], axis=1)          # (192, 256)
    vis_b = jnp.concatenate(
        [p["patch_b"], p["patch_b"] @ p["proj_w"] + p["proj_b"]], axis=0)

    wqkv = jnp.concatenate(
        [blk["wq"] * ATTN_SCALE, blk["wk"], blk["wv"]], axis=1)      # (128, 384)
    wqkv = blk["ln1_g"][:, None] * wqkv                              # fold ln1 gain
    w_up = blk["ln2_g"][:, None] * blk["w_up"]                       # fold ln2 gain
    head_w = p["lnf_g"][:, None] * p["head_w"]                       # fold final gain

    row = jnp.arange(SEQ)[:, None]
    col = jnp.arange(SEQ)[None, :]
    mask = jnp.where(col <= row, 0.0, NEG_INF).astype(DTYPE)         # (SEQ, SEQ)

    return {
        "vis_w": vis_w.astype(MXU_DTYPE),                            # (192, 256)
        "vis_b": vis_b.reshape(1, VIS_FUSED),
        "tok_emb": p["tok_emb"],                                     # f32 (exact gather)
        "wqkv": wqkv.astype(MXU_DTYPE),                              # (128, 384)
        "wo": blk["wo"].astype(MXU_DTYPE),
        "w_up": w_up.astype(MXU_DTYPE),
        "b_up": blk["b_up"].reshape(1, MLP_DIM),
        "w_dn": blk["w_dn"].astype(MXU_DTYPE),
        "b_dn": blk["b_dn"].reshape(1, HIDDEN),
        "head_w": head_w.astype(MXU_DTYPE),
        "mask": mask,
    }


# --------------------------------- forward -----------------------------------
def _im2col_patches(agent_images):
    """(B, A, C, H, W) images -> (B, num_tokens, C*P*P) patch matrix
    (stride-P conv im2col).  Pure layout plumbing; stays in the XLA wrapper."""
    B, A, C, H, W = agent_images.shape
    hp, wp = H // PATCH, W // PATCH
    x = agent_images.reshape(B, A, C, hp, PATCH, wp, PATCH)
    x = x.transpose(0, 1, 3, 5, 2, 4, 6)                 # B, A, hp, wp, C, P, P
    return x.reshape(B, A * hp * wp, C * PATCH * PATCH)


def _const_spec(shape):
    """Full-array block, constant index_map -> weight stays VMEM-resident."""
    return pl.BlockSpec(shape, lambda b: (0,) * len(shape))


@jax.jit
def mavln_forward(packed, agent_images, text_token_ids):
    """Synthetic MAVLN.forward(..., return_logits=True) — one fused, batched
    Pallas call.  agent_images: (B, A, C, H, W); text_token_ids: (B, TEXT_LEN)."""
    patches = _im2col_patches(agent_images.astype(jnp.float32)).astype(MXU_DTYPE)
    ids = text_token_ids.astype(jnp.int32).reshape(BATCH, TEXT_LEN, 1)

    weight_args = (
        packed["vis_w"], packed["vis_b"], packed["tok_emb"],
        packed["wqkv"], packed["wo"],
        packed["w_up"], packed["b_up"], packed["w_dn"], packed["b_dn"],
        packed["head_w"], packed["mask"],
    )

    in_specs = [
        # per-sequence inputs: batch dim squeezed out of the kernel view
        pl.BlockSpec((None, IMG_TOKENS, PATCH_DIM), lambda b: (b, 0, 0)),
        pl.BlockSpec((None, TEXT_LEN, 1), lambda b: (b, 0, 0)),
    ] + [_const_spec(w.shape) for w in weight_args]

    out_shapes = (
        jax.ShapeDtypeStruct((BATCH, IMG_TOKENS, VISION_DIM), DTYPE),  # image_hidden
        jax.ShapeDtypeStruct((BATCH, SEQ, HIDDEN), DTYPE),             # h0 (embeds)
        jax.ShapeDtypeStruct((BATCH, SEQ, HIDDEN), DTYPE),             # h1 (post block)
        jax.ShapeDtypeStruct((BATCH, SEQ, VOCAB), DTYPE),              # logits
    )
    out_specs = (
        pl.BlockSpec((None, IMG_TOKENS, VISION_DIM), lambda b: (b, 0, 0)),
        pl.BlockSpec((None, SEQ, HIDDEN), lambda b: (b, 0, 0)),
        pl.BlockSpec((None, SEQ, HIDDEN), lambda b: (b, 0, 0)),
        pl.BlockSpec((None, SEQ, VOCAB), lambda b: (b, 0, 0)),
    )

    img_hidden, h0, h1, logits = pl.pallas_call(
        _fused_forward_kernel,
        out_shape=out_shapes,
        grid=(BATCH,),
        in_specs=in_specs,
        out_specs=out_specs,
        compiler_params=pltpu.CompilerParams(
            dimension_semantics=("parallel",)),     # v7x: 2 TCs split the batch
    )(patches, ids, *weight_args)

    return {
        "logits": logits,                          # (B, SEQ, VOCAB)
        "hidden_states": (h0, h1),
        "image_hidden_states": img_hidden,         # (B, IMG_TOKENS, VISION_DIM)
    }
    # TODO(synk): autoregressive generate_response / prompt building / regex
    # action parsing are host-side string logic with no tensor compute to port.
    # TODO(synk): for full MXU occupancy on v6e/v7x, fold the batch into the M
    # dimension of the non-attention matmuls (M >= 128/256) instead of (or in
    # addition to) the per-sequence grid; at SEQ=40 each matmul uses <=16% of a
    # 256-row MXU pass.


# ----------------------------------- main ------------------------------------
if __name__ == "__main__":
    key = jax.random.PRNGKey(0)
    k_param, k_img, k_txt = jax.random.split(key, 3)

    params = init_params(k_param)
    packed = pack_params(params)

    agent_images = jax.random.uniform(
        k_img, (BATCH, NUM_AGENTS, IMG_C, IMG_H, IMG_W), dtype=DTYPE)   # B,A,C,H,W
    text_token_ids = jax.random.randint(k_txt, (BATCH, TEXT_LEN), 0, VOCAB)

    out = mavln_forward(packed, agent_images, text_token_ids)
    jax.block_until_ready(out)

    assert out["logits"].shape == (BATCH, SEQ, VOCAB)
    assert out["image_hidden_states"].shape == (BATCH, IMG_TOKENS, VISION_DIM)
    assert out["hidden_states"][0].shape == (BATCH, SEQ, HIDDEN)
    assert out["hidden_states"][1].shape == (BATCH, SEQ, HIDDEN)
    assert bool(jnp.all(jnp.isfinite(out["logits"])))
    assert bool(jnp.all(jnp.isfinite(out["hidden_states"][0])))
    assert bool(jnp.all(jnp.isfinite(out["hidden_states"][1])))
    assert bool(jnp.all(jnp.isfinite(out["image_hidden_states"])))
    print("KERNEL_OK")
</pallas_src>

<mosaic_0001>
module attributes {stable_mosaic.version = 11 : i64} {
  func.func @_fused_forward_kernel(%arg0: i32, %arg1: memref<1x32x192xbf16, #tpu.memory_space<vmem>>, %arg2: memref<1x8x1xi32, #tpu.memory_space<vmem>>, %arg3: memref<192x256xbf16, #tpu.memory_space<vmem>>, %arg4: memref<1x256xf32, #tpu.memory_space<vmem>>, %arg5: memref<256x128xf32, #tpu.memory_space<vmem>>, %arg6: memref<128x384xbf16, #tpu.memory_space<vmem>>, %arg7: memref<128x128xbf16, #tpu.memory_space<vmem>>, %arg8: memref<128x256xbf16, #tpu.memory_space<vmem>>, %arg9: memref<1x256xf32, #tpu.memory_space<vmem>>, %arg10: memref<256x128xbf16, #tpu.memory_space<vmem>>, %arg11: memref<1x128xf32, #tpu.memory_space<vmem>>, %arg12: memref<128x256xbf16, #tpu.memory_space<vmem>>, %arg13: memref<40x40xf32, #tpu.memory_space<vmem>>, %arg14: memref<1x32x128xf32, #tpu.memory_space<vmem>>, %arg15: memref<1x40x128xf32, #tpu.memory_space<vmem>>, %arg16: memref<1x40x128xf32, #tpu.memory_space<vmem>>, %arg17: memref<1x40x256xf32, #tpu.memory_space<vmem>>) attributes {dimension_semantics = [#tpu.dimension_semantics<parallel>], iteration_bounds = array<i64: 4>, scalar_prefetch = 0 : i64, scratch_operands = 0 : i64, tpu.core_type = #tpu.core_type<tc>, window_params = [{transform_indices = @transform_0, window_bounds = array<i64: 1, 32, 192>}, {transform_indices = @transform_1, window_bounds = array<i64: 1, 8, 1>}, {pipeline_mode = #tpu.pipeline_mode<synchronous>, transform_indices = @transform_2, window_bounds = array<i64: 192, 256>}, {pipeline_mode = #tpu.pipeline_mode<synchronous>, transform_indices = @transform_3, window_bounds = array<i64: 1, 256>}, {pipeline_mode = #tpu.pipeline_mode<synchronous>, transform_indices = @transform_4, window_bounds = array<i64: 256, 128>}, {pipeline_mode = #tpu.pipeline_mode<synchronous>, transform_indices = @transform_5, window_bounds = array<i64: 128, 384>}, {pipeline_mode = #tpu.pipeline_mode<synchronous>, transform_indices = @transform_6, window_bounds = array<i64: 128, 128>}, {pipeline_mode = #tpu.pipeline_mode<synchronous>, transform_indices = @transform_7, window_bounds = array<i64: 128, 256>}, {pipeline_mode = #tpu.pipeline_mode<synchronous>, transform_indices = @transform_8, window_bounds = array<i64: 1, 256>}, {pipeline_mode = #tpu.pipeline_mode<synchronous>, transform_indices = @transform_9, window_bounds = array<i64: 256, 128>}, {pipeline_mode = #tpu.pipeline_mode<synchronous>, transform_indices = @transform_10, window_bounds = array<i64: 1, 128>}, {pipeline_mode = #tpu.pipeline_mode<synchronous>, transform_indices = @transform_11, window_bounds = array<i64: 128, 256>}, {pipeline_mode = #tpu.pipeline_mode<synchronous>, transform_indices = @transform_12, window_bounds = array<i64: 40, 40>}, {transform_indices = @transform_13, window_bounds = array<i64: 1, 32, 128>}, {transform_indices = @transform_14, window_bounds = array<i64: 1, 40, 128>}, {transform_indices = @transform_15, window_bounds = array<i64: 1, 40, 128>}, {transform_indices = @transform_16, window_bounds = array<i64: 1, 40, 256>}]} {
    %c0 = arith.constant 0 : index
    %c0_0 = arith.constant 0 : index
    %c0_1 = arith.constant 0 : index
    %0 = vector.load %arg1[%c0, %c0_0, %c0_1] : memref<1x32x192xbf16, #tpu.memory_space<vmem>>, vector<1x32x192xbf16>
    %1 = vector.shape_cast %0 : vector<1x32x192xbf16> to vector<32x192xbf16>
    %c0_2 = arith.constant 0 : index
    %c0_3 = arith.constant 0 : index
    %2 = vector.load %arg3[%c0_2, %c0_3] : memref<192x256xbf16, #tpu.memory_space<vmem>>, vector<192x256xbf16>
    %cst = arith.constant dense<0.000000e+00> : vector<32x256xf32>
    %3 = tpu.matmul %1, %2, %cst {dimension_numbers = #tpu.dot_dimension_numbers<[1], [0], [0], [1], [0, 0, 1, 1], [], []>} : vector<32x192xbf16>, vector<192x256xbf16>, vector<32x256xf32> -> vector<32x256xf32>
    %c0_4 = arith.constant 0 : index
    %c0_5 = arith.constant 0 : index
    %4 = vector.load %arg4[%c0_4, %c0_5] : memref<1x256xf32, #tpu.memory_space<vmem>>, vector<1x256xf32>
    %5 = vector.broadcast %4 : vector<1x256xf32> to vector<32x256xf32>
    %6 = arith.addf %3, %5 : vector<32x256xf32>
    %7 = vector.extract_strided_slice %6 {offsets = [0, 0], sizes = [32, 128], strides = [1, 1]} : vector<32x256xf32> to vector<32x128xf32>
    %8 = vector.extract_strided_slice %6 {offsets = [0, 128], sizes = [32, 128], strides = [1, 1]} : vector<32x256xf32> to vector<32x128xf32>
    %c0_6 = arith.constant 0 : index
    %c0_7 = arith.constant 0 : index
    %c0_8 = arith.constant 0 : index
    %9 = vector.load %arg14[%c0_6, %c0_7, %c0_8] : memref<1x32x128xf32, #tpu.memory_space<vmem>>, vector<1x32x128xf32>
    %10 = vector.shape_cast %9 : vector<1x32x128xf32> to vector<32x128xf32>
    %11 = vector.shape_cast %7 : vector<32x128xf32> to vector<1x32x128xf32>
    tpu.vector_store %arg14[%c0_6, %c0_7, %c0_8], %11 {strides = array<i32>} : memref<1x32x128xf32, #tpu.memory_space<vmem>>, vector<1x32x128xf32>,
    %c0_9 = arith.constant 0 : index
    %c0_10 = arith.constant 0 : index
    %c0_11 = arith.constant 0 : index
    %12 = vector.load %arg2[%c0_9, %c0_10, %c0_11] : memref<1x8x1xi32, #tpu.memory_space<vmem>>, vector<1x8x1xi32>
    %13 = vector.shape_cast %12 : vector<1x8x1xi32> to vector<8x1xi32>
    %14 = tpu.iota {dimensions = array<i32: 1>} : vector<8x256xi32>
    %15 = vector.broadcast %13 : vector<8x1xi32> to vector<8x256xi32>
    %16 = arith.cmpi eq, %14, %15 : vector<8x256xi32>
    %17 = arith.extui %16 : vector<8x256xi1> to vector<8x256xi32>
    %18 = arith.sitofp %17 : vector<8x256xi32> to vector<8x256xf32>
    %c0_12 = arith.constant 0 : index
    %c0_13 = arith.constant 0 : index
    %19 = vector.load %arg5[%c0_12, %c0_13] : memref<256x128xf32, #tpu.memory_space<vmem>>, vector<256x128xf32>
    %cst_14 = arith.constant dense<0.000000e+00> : vector<8x128xf32>
    %20 = tpu.matmul %18, %19, %cst_14 {dimension_numbers = #tpu.dot_dimension_numbers<[1], [0], [0], [1], [0, 0, 1, 1], [], []>} : vector<8x256xf32>, vector<256x128xf32>, vector<8x128xf32> -> vector<8x128xf32>
    %21 = tpu.concatenate %8, %20 in 0 : vector<32x128xf32>, vector<8x128xf32> -> vector<40x128xf32>
    %c0_15 = arith.constant 0 : index
    %c0_16 = arith.constant 0 : index
    %c0_17 = arith.constant 0 : index
    %22 = vector.load %arg15[%c0_15, %c0_16, %c0_17] : memref<1x40x128xf32, #tpu.memory_space<vmem>>, vector<1x40x128xf32>
    %23 = vector.shape_cast %22 : vector<1x40x128xf32> to vector<40x128xf32>
    %24 = vector.shape_cast %21 : vector<40x128xf32> to vector<1x40x128xf32>
    tpu.vector_store %arg15[%c0_15, %c0_16, %c0_17], %24 {strides = array<i32>} : memref<1x40x128xf32, #tpu.memory_space<vmem>>, vector<1x40x128xf32>,
    %25 = arith.mulf %21, %21 : vector<40x128xf32>
    %cst_18 = arith.constant dense<0.000000e+00> : vector<40xf32>
    %26 = vector.multi_reduction <add>, %25, %cst_18 [1] : vector<40x128xf32> to vector<40xf32>
    %27 = vector.shape_cast %26 : vector<40xf32> to vector<40x1xf32>
    %cst_19 = arith.constant 1.280000e+02 : f32
    %28 = vector.broadcast %cst_19 : f32 to vector<40x1xf32>
    %29 = arith.divf %27, %28 : vector<40x1xf32>
    %cst_20 = arith.constant 9.99999997E-7 : f32
    %30 = vector.broadcast %cst_20 : f32 to vector<40x1xf32>
    %31 = arith.addf %29, %30 : vector<40x1xf32>
    %32 = math.rsqrt %31 : vector<40x1xf32>
    %33 = vector.broadcast %32 : vector<40x1xf32> to vector<40x128xf32>
    %34 = arith.mulf %21, %33 : vector<40x128xf32>
    %35 = arith.truncf %34 : vector<40x128xf32> to vector<40x128xbf16>
    %c0_21 = arith.constant 0 : index
    %c0_22 = arith.constant 0 : index
    %36 = vector.load %arg6[%c0_21, %c0_22] : memref<128x384xbf16, #tpu.memory_space<vmem>>, vector<128x384xbf16>
    %cst_23 = arith.constant dense<0.000000e+00> : vector<40x384xf32>
    %37 = tpu.matmul %35, %36, %cst_23 {dimension_numbers = #tpu.dot_dimension_numbers<[1], [0], [0], [1], [0, 0, 1, 1], [], []>} : vector<40x128xbf16>, vector<128x384xbf16>, vector<40x384xf32> -> vector<40x384xf32>
    %38 = vector.extract_strided_slice %37 {offsets = [0, 0], sizes = [40, 128], strides = [1, 1]} : vector<40x384xf32> to vector<40x128xf32>
    %39 = vector.extract_strided_slice %37 {offsets = [0, 128], sizes = [40, 128], strides = [1, 1]} : vector<40x384xf32> to vector<40x128xf32>
    %40 = vector.extract_strided_slice %37 {offsets = [0, 256], sizes = [40, 128], strides = [1, 1]} : vector<40x384xf32> to vector<40x128xf32>
    %41 = arith.truncf %38 : vector<40x128xf32> to vector<40x128xbf16>
    %42 = arith.truncf %39 : vector<40x128xf32> to vector<40x128xbf16>
    %cst_24 = arith.constant dense<0.000000e+00> : vector<40x40xf32>
    %43 = tpu.matmul %41, %42, %cst_24 {dimension_numbers = #tpu.dot_dimension_numbers<[1], [1], [0], [0], [0, 0, 1, 0], [], []>} : vector<40x128xbf16>, vector<40x128xbf16>, vector<40x40xf32> -> vector<40x40xf32>
    %c0_25 = arith.constant 0 : index
    %c0_26 = arith.constant 0 : index
    %44 = vector.load %arg13[%c0_25, %c0_26] : memref<40x40xf32, #tpu.memory_space<vmem>>, vector<40x40xf32>
    %45 = arith.addf %43, %44 : vector<40x40xf32>
    %cst_27 = arith.constant dense<0xFF800000> : vector<40xf32>
    %46 = vector.multi_reduction <maximumf>, %45, %cst_27 [1] : vector<40x40xf32> to vector<40xf32>
    %47 = vector.shape_cast %46 : vector<40xf32> to vector<40x1xf32>
    %48 = vector.broadcast %47 : vector<40x1xf32> to vector<40x40xf32>
    %49 = arith.subf %45, %48 : vector<40x40xf32>
    %50 = math.exp %49 : vector<40x40xf32>
    %cst_28 = arith.constant dense<0.000000e+00> : vector<40xf32>
    %51 = vector.multi_reduction <add>, %50, %cst_28 [1] : vector<40x40xf32> to vector<40xf32>
    %52 = vector.shape_cast %51 : vector<40xf32> to vector<40x1xf32>
    %53 = tpu.reciprocal %52 {approx = true} : vector<40x1xf32> -> vector<40x1xf32>
    %54 = vector.broadcast %53 : vector<40x1xf32> to vector<40x40xf32>
    %55 = arith.mulf %50, %54 : vector<40x40xf32>
    %56 = arith.truncf %55 : vector<40x40xf32> to vector<40x40xbf16>
    %57 = arith.truncf %40 : vector<40x128xf32> to vector<40x128xbf16>
    %cst_29 = arith.constant dense<0.000000e+00> : vector<40x128xf32>
    %58 = tpu.matmul %56, %57, %cst_29 {dimension_numbers = #tpu.dot_dimension_numbers<[1], [0], [0], [1], [0, 0, 1, 1], [], []>} : vector<40x40xbf16>, vector<40x128xbf16>, vector<40x128xf32> -> vector<40x128xf32>
    %59 = arith.truncf %58 : vector<40x128xf32> to vector<40x128xbf16>
    %c0_30 = arith.constant 0 : index
    %c0_31 = arith.constant 0 : index
    %60 = vector.load %arg7[%c0_30, %c0_31] : memref<128x128xbf16, #tpu.memory_space<vmem>>, vector<128x128xbf16>
    %cst_32 = arith.constant dense<0.000000e+00> : vector<40x128xf32>
    %61 = tpu.matmul %59, %60, %cst_32 {dimension_numbers = #tpu.dot_dimension_numbers<[1], [0], [0], [1], [0, 0, 1, 1], [], []>} : vector<40x128xbf16>, vector<128x128xbf16>, vector<40x128xf32> -> vector<40x128xf32>
    %62 = arith.addf %21, %61 : vector<40x128xf32>
    %63 = arith.mulf %62, %62 : vector<40x128xf32>
    %cst_33 = arith.constant dense<0.000000e+00> : vector<40xf32>
    %64 = vector.multi_reduction <add>, %63, %cst_33 [1] : vector<40x128xf32> to vector<40xf32>
    %65 = vector.shape_cast %64 : vector<40xf32> to vector<40x1xf32>
    %cst_34 = arith.constant 1.280000e+02 : f32
    %66 = vector.broadcast %cst_34 : f32 to vector<40x1xf32>
    %67 = arith.divf %65, %66 : vector<40x1xf32>
    %cst_35 = arith.constant 9.99999997E-7 : f32
    %68 = vector.broadcast %cst_35 : f32 to vector<40x1xf32>
    %69 = arith.addf %67, %68 : vector<40x1xf32>
    %70 = math.rsqrt %69 : vector<40x1xf32>
    %71 = vector.broadcast %70 : vector<40x1xf32> to vector<40x128xf32>
    %72 = arith.mulf %62, %71 : vector<40x128xf32>
    %73 = arith.truncf %72 : vector<40x128xf32> to vector<40x128xbf16>
    %c0_36 = arith.constant 0 : index
    %c0_37 = arith.constant 0 : index
    %74 = vector.load %arg8[%c0_36, %c0_37] : memref<128x256xbf16, #tpu.memory_space<vmem>>, vector<128x256xbf16>
    %cst_38 = arith.constant dense<0.000000e+00> : vector<40x256xf32>
    %75 = tpu.matmul %73, %74, %cst_38 {dimension_numbers = #tpu.dot_dimension_numbers<[1], [0], [0], [1], [0, 0, 1, 1], [], []>} : vector<40x128xbf16>, vector<128x256xbf16>, vector<40x256xf32> -> vector<40x256xf32>
    %c0_39 = arith.constant 0 : index
    %c0_40 = arith.constant 0 : index
    %76 = vector.load %arg9[%c0_39, %c0_40] : memref<1x256xf32, #tpu.memory_space<vmem>>, vector<1x256xf32>
    %77 = vector.broadcast %76 : vector<1x256xf32> to vector<40x256xf32>
    %78 = arith.addf %75, %77 : vector<40x256xf32>
    %79 = arith.mulf %78, %78 : vector<40x256xf32>
    %80 = arith.mulf %78, %79 : vector<40x256xf32>
    %cst_41 = arith.constant 4.471500e-02 : f32
    %81 = vector.broadcast %cst_41 : f32 to vector<40x256xf32>
    %82 = arith.mulf %81, %80 : vector<40x256xf32>
    %83 = arith.addf %78, %82 : vector<40x256xf32>
    %cst_42 = arith.constant 0.797884583 : f32
    %84 = vector.broadcast %cst_42 : f32 to vector<40x256xf32>
    %85 = arith.mulf %84, %83 : vector<40x256xf32>
    %86 = math.tanh %85 : vector<40x256xf32>
    %cst_43 = arith.constant 1.000000e+00 : f32
    %87 = vector.broadcast %cst_43 : f32 to vector<40x256xf32>
    %88 = arith.addf %87, %86 : vector<40x256xf32>
    %cst_44 = arith.constant 5.000000e-01 : f32
    %89 = vector.broadcast %cst_44 : f32 to vector<40x256xf32>
    %90 = arith.mulf %89, %88 : vector<40x256xf32>
    %91 = arith.mulf %78, %90 : vector<40x256xf32>
    %92 = arith.truncf %91 : vector<40x256xf32> to vector<40x256xbf16>
    %c0_45 = arith.constant 0 : index
    %c0_46 = arith.constant 0 : index
    %93 = vector.load %arg10[%c0_45, %c0_46] : memref<256x128xbf16, #tpu.memory_space<vmem>>, vector<256x128xbf16>
    %cst_47 = arith.constant dense<0.000000e+00> : vector<40x128xf32>
    %94 = tpu.matmul %92, %93, %cst_47 {dimension_numbers = #tpu.dot_dimension_numbers<[1], [0], [0], [1], [0, 0, 1, 1], [], []>} : vector<40x256xbf16>, vector<256x128xbf16>, vector<40x128xf32> -> vector<40x128xf32>
    %c0_48 = arith.constant 0 : index
    %c0_49 = arith.constant 0 : index
    %95 = vector.load %arg11[%c0_48, %c0_49] : memref<1x128xf32, #tpu.memory_space<vmem>>, vector<1x128xf32>
    %96 = vector.broadcast %95 : vector<1x128xf32> to vector<40x128xf32>
    %97 = arith.addf %94, %96 : vector<40x128xf32>
    %98 = arith.addf %62, %97 : vector<40x128xf32>
    %c0_50 = arith.constant 0 : index
    %c0_51 = arith.constant 0 : index
    %c0_52 = arith.constant 0 : index
    %99 = vector.load %arg16[%c0_50, %c0_51, %c0_52] : memref<1x40x128xf32, #tpu.memory_space<vmem>>, vector<1x40x128xf32>
    %100 = vector.shape_cast %99 : vector<1x40x128xf32> to vector<40x128xf32>
    %101 = vector.shape_cast %98 : vector<40x128xf32> to vector<1x40x128xf32>
    tpu.vector_store %arg16[%c0_50, %c0_51, %c0_52], %101 {strides = array<i32>} : memref<1x40x128xf32, #tpu.memory_space<vmem>>, vector<1x40x128xf32>,
    %102 = arith.mulf %98, %98 : vector<40x128xf32>
    %cst_53 = arith.constant dense<0.000000e+00> : vector<40xf32>
    %103 = vector.multi_reduction <add>, %102, %cst_53 [1] : vector<40x128xf32> to vector<40xf32>
    %104 = vector.shape_cast %103 : vector<40xf32> to vector<40x1xf32>
    %cst_54 = arith.constant 1.280000e+02 : f32
    %105 = vector.broadcast %cst_54 : f32 to vector<40x1xf32>
    %106 = arith.divf %104, %105 : vector<40x1xf32>
    %cst_55 = arith.constant 9.99999997E-7 : f32
    %107 = vector.broadcast %cst_55 : f32 to vector<40x1xf32>
    %108 = arith.addf %106, %107 : vector<40x1xf32>
    %109 = math.rsqrt %108 : vector<40x1xf32>
    %110 = vector.broadcast %109 : vector<40x1xf32> to vector<40x128xf32>
    %111 = arith.mulf %98, %110 : vector<40x128xf32>
    %112 = arith.truncf %111 : vector<40x128xf32> to vector<40x128xbf16>
    %c0_56 = arith.constant 0 : index
    %c0_57 = arith.constant 0 : index
    %113 = vector.load %arg12[%c0_56, %c0_57] : memref<128x256xbf16, #tpu.memory_space<vmem>>, vector<128x256xbf16>
    %cst_58 = arith.constant dense<0.000000e+00> : vector<40x256xf32>
    %114 = tpu.matmul %112, %113, %cst_58 {dimension_numbers = #tpu.dot_dimension_numbers<[1], [0], [0], [1], [0, 0, 1, 1], [], []>} : vector<40x128xbf16>, vector<128x256xbf16>, vector<40x256xf32> -> vector<40x256xf32>
    %c0_59 = arith.constant 0 : index
    %c0_60 = arith.constant 0 : index
    %c0_61 = arith.constant 0 : index
    %115 = vector.load %arg17[%c0_59, %c0_60, %c0_61] : memref<1x40x256xf32, #tpu.memory_space<vmem>>, vector<1x40x256xf32>
    %116 = vector.shape_cast %115 : vector<1x40x256xf32> to vector<40x256xf32>
    %117 = vector.shape_cast %114 : vector<40x256xf32> to vector<1x40x256xf32>
    tpu.vector_store %arg17[%c0_59, %c0_60, %c0_61], %117 {strides = array<i32>} : memref<1x40x256xf32, #tpu.memory_space<vmem>>, vector<1x40x256xf32>,
    return
  }
  func.func @transform_0(%arg0: i32) -> (i32, i32, i32) {
    %c0_i32 = arith.constant 0 : i32
    %c0_i32_0 = arith.constant 0 : i32
    %c0_i32_1 = arith.constant 0 : i32
    return %arg0, %c0_i32, %c0_i32_0 : i32, i32, i32
  }
  func.func @transform_1(%arg0: i32) -> (i32, i32, i32) {
    %c0_i32 = arith.constant 0 : i32
    %c0_i32_0 = arith.constant 0 : i32
    %c0_i32_1 = arith.constant 0 : i32
    return %arg0, %c0_i32, %c0_i32_0 : i32, i32, i32
  }
  func.func @transform_2(%arg0: i32) -> (i32, i32) {
    %c0_i32 = arith.constant 0 : i32
    %c0_i32_0 = arith.constant 0 : i32
    %c0_i32_1 = arith.constant 0 : i32
    return %c0_i32, %c0_i32_0 : i32, i32
  }
  func.func @transform_3(%arg0: i32) -> (i32, i32) {
    %c0_i32 = arith.constant 0 : i32
    %c0_i32_0 = arith.constant 0 : i32
    %c0_i32_1 = arith.constant 0 : i32
    return %c0_i32, %c0_i32_0 : i32, i32
  }
  func.func @transform_4(%arg0: i32) -> (i32, i32) {
    %c0_i32 = arith.constant 0 : i32
    %c0_i32_0 = arith.constant 0 : i32
    %c0_i32_1 = arith.constant 0 : i32
    return %c0_i32, %c0_i32_0 : i32, i32
  }
  func.func @transform_5(%arg0: i32) -> (i32, i32) {
    %c0_i32 = arith.constant 0 : i32
    %c0_i32_0 = arith.constant 0 : i32
    %c0_i32_1 = arith.constant 0 : i32
    return %c0_i32, %c0_i32_0 : i32, i32
  }
  func.func @transform_6(%arg0: i32) -> (i32, i32) {
    %c0_i32 = arith.constant 0 : i32
    %c0_i32_0 = arith.constant 0 : i32
    %c0_i32_1 = arith.constant 0 : i32
    return %c0_i32, %c0_i32_0 : i32, i32
  }
  func.func @transform_7(%arg0: i32) -> (i32, i32) {
    %c0_i32 = arith.constant 0 : i32
    %c0_i32_0 = arith.constant 0 : i32
    %c0_i32_1 = arith.constant 0 : i32
    return %c0_i32, %c0_i32_0 : i32, i32
  }
  func.func @transform_8(%arg0: i32) -> (i32, i32) {
    %c0_i32 = arith.constant 0 : i32
    %c0_i32_0 = arith.constant 0 : i32
    %c0_i32_1 = arith.constant 0 : i32
    return %c0_i32, %c0_i32_0 : i32, i32
  }
  func.func @transform_9(%arg0: i32) -> (i32, i32) {
    %c0_i32 = arith.constant 0 : i32
    %c0_i32_0 = arith.constant 0 : i32
    %c0_i32_1 = arith.constant 0 : i32
    return %c0_i32, %c0_i32_0 : i32, i32
  }
  func.func @transform_10(%arg0: i32) -> (i32, i32) {
    %c0_i32 = arith.constant 0 : i32
    %c0_i32_0 = arith.constant 0 : i32
    %c0_i32_1 = arith.constant 0 : i32
    return %c0_i32, %c0_i32_0 : i32, i32
  }
  func.func @transform_11(%arg0: i32) -> (i32, i32) {
    %c0_i32 = arith.constant 0 : i32
    %c0_i32_0 = arith.constant 0 : i32
    %c0_i32_1 = arith.constant 0 : i32
    return %c0_i32, %c0_i32_0 : i32, i32
  }
  func.func @transform_12(%arg0: i32) -> (i32, i32) {
    %c0_i32 = arith.constant 0 : i32
    %c0_i32_0 = arith.constant 0 : i32
    %c0_i32_1 = arith.constant 0 : i32
    return %c0_i32, %c0_i32_0 : i32, i32
  }
  func.func @transform_13(%arg0: i32) -> (i32, i32, i32) {
    %c0_i32 = arith.constant 0 : i32
    %c0_i32_0 = arith.constant 0 : i32
    %c0_i32_1 = arith.constant 0 : i32
    return %arg0, %c0_i32, %c0_i32_0 : i32, i32, i32
  }
  func.func @transform_14(%arg0: i32) -> (i32, i32, i32) {
    %c0_i32 = arith.constant 0 : i32
    %c0_i32_0 = arith.constant 0 : i32
    %c0_i32_1 = arith.constant 0 : i32
    return %arg0, %c0_i32, %c0_i32_0 : i32, i32, i32
  }
  func.func @transform_15(%arg0: i32) -> (i32, i32, i32) {
    %c0_i32 = arith.constant 0 : i32
    %c0_i32_0 = arith.constant 0 : i32
    %c0_i32_1 = arith.constant 0 : i32
    return %arg0, %c0_i32, %c0_i32_0 : i32, i32, i32
  }
  func.func @transform_16(%arg0: i32) -> (i32, i32, i32) {
    %c0_i32 = arith.constant 0 : i32
    %c0_i32_0 = arith.constant 0 : i32
    %c0_i32_1 = arith.constant 0 : i32
    return %arg0, %c0_i32, %c0_i32_0 : i32, i32, i32
  }
}

</mosaic_0001>

<llo_original>
// kernel: mavln_forward.1
$region0: #{mavln_forward.1}
  #allocation0 [shape = 'u32[]', space=smem, size = 0x4, offset = 0x4, fixed_abs, tag = 'smem constant byte address 0x4 - core index']
  #allocation1 [shape = 'u32[72,128]{1,0:T(1,128)}', space=vmem, size = 0x9000, scoped, tag = 'internal scratch']
  %s0 = inlined_call_operand.vmem [shape: bf16[4,32,192], index: 0, kind: input, shape index: {}]
  %s1 = inlined_call_operand.vmem [shape: s32[4,8,1], index: 1, kind: input, shape index: {}]
  %s2 = inlined_call_operand.vmem [shape: bf16[192,256], index: 2, kind: input, shape index: {}]
  %s3 = inlined_call_operand.vmem [shape: f32[1,256], index: 3, kind: input, shape index: {}]
  %s4 = inlined_call_operand.vmem [shape: f32[256,128], index: 4, kind: input, shape index: {}]
  %s5 = inlined_call_operand.vmem [shape: bf16[128,384], index: 5, kind: input, shape index: {}]
  %s6 = inlined_call_operand.vmem [shape: bf16[128,128], index: 6, kind: input, shape index: {}]
  %s7 = inlined_call_operand.vmem [shape: bf16[128,256], index: 7, kind: input, shape index: {}]
  %s8 = inlined_call_operand.vmem [shape: f32[1,256], index: 8, kind: input, shape index: {}]
  %s9 = inlined_call_operand.vmem [shape: bf16[256,128], index: 9, kind: input, shape index: {}]
  %s10 = inlined_call_operand.vmem [shape: f32[1,128], index: 10, kind: input, shape index: {}]
  %s11 = inlined_call_operand.vmem [shape: bf16[128,256], index: 11, kind: input, shape index: {}]
  %s12 = inlined_call_operand.vmem [shape: f32[40,40], index: 12, kind: input, shape index: {}]
  %s13 = inlined_call_operand.hbm [shape: f32[4,32,128], index: 13, kind: output, shape index: {0}]
  %s14 = inlined_call_operand.hbm [shape: f32[4,40,128], index: 14, kind: output, shape index: {1}]
  %s15 = inlined_call_operand.hbm [shape: f32[4,40,128], index: 15, kind: output, shape index: {2}]
  %s16 = inlined_call_operand.hbm [shape: f32[4,40,256], index: 16, kind: output, shape index: {3}]
  %17 = xla_tuple %s13, %s14, %s15, %s16
  %s18 = sld [smem:[#allocation0]]
  $region109: #{mavln_forward.1} parent=0
    _
  %s20 = ssub.s32 1, %s18
  %s21 = scalar_select 0, %s20, %s18
  $region1: #{mavln_forward.1} parent=0
    #allocation2 [shape = 'u8[32768]{0}', space=vmem, size = 0x8000, scoped, tag = 'output window, operand 0']
    #allocation3 [shape = 's32[2]{0}', space=sflag, size = 0x8, scoped, tag = 'scoped memory for mavln_forward.1']
    #allocation4 [shape = 'u8[40960]{0}', space=vmem, size = 0xa000, scoped, tag = 'output window, operand 1']
    #allocation5 [shape = 's32[2]{0}', space=sflag, size = 0x8, scoped, tag = 'scoped memory for mavln_forward.1']
    #allocation6 [shape = 'u8[40960]{0}', space=vmem, size = 0xa000, scoped, tag = 'output window, operand 2']
    #allocation7 [shape = 'u8[81920]{0}', space=vmem, size = 0x14000, scoped, tag = 'output window, operand 3']
    #allocation8 [shape = 's32[2]{0}', space=sflag, size = 0x8, scoped, tag = 'scoped memory for mavln_forward.1']
    %22 = vsyncpa [#allocation3], 0
    %s23 = scalar_lea.sflag [#allocation3], 1
    %24 = vsyncpa %s23, 0
    %25 = vsyncpa [#allocation5], 0
    %s26 = scalar_lea.sflag [#allocation5], 1
    %27 = vsyncpa %s26, 0
    %28 = vsyncpa [#allocation8], 0
    %s29 = scalar_lea.sflag [#allocation8], 1
    %30 = vsyncpa %s29, 0
    loop: start=0, step=1, limit=6
    $region2: #{mavln_forward.1} parent=1 // loop_pre_header
      _
    $region3: #{mavln_forward.1} parent=1 // loop_header
      %s32 = sphi 0, %s36
      %p33 = scmp.ge.s32.totalorder %s32, 6
      %s42 = sphi 0, %s44
      %s45 = sphi 0, %s42
      %s46 = sphi 0, %s45
      %s62 = sphi 0, %s46
      %s68 = sphi 0, %s70
      %s71 = sphi 0, %s68
      %s72 = sphi 0, %s71
      %s88 = sphi 0, %s72
      %s92 = sphi 0, %s92
      %s94 = sphi 0, %s92
      %s95 = sphi 0, %s94
      %s109 = sphi 0, %s95
      %s113 = sphi 0, %s113
      %s115 = sphi 0, %s113
      %s116 = sphi 0, %s115
      %s130 = sphi 0, %s116
      %s134 = sphi 0, %s134
      %s136 = sphi 0, %s134
      %s137 = sphi 0, %s136
      %s151 = sphi 0, %s137
      %s155 = sphi 0, %s155
      %s157 = sphi 0, %s155
      %s158 = sphi 0, %s157
      %s172 = sphi 0, %s158
      %s176 = sphi 0, %s176
      %s178 = sphi 0, %s176
      %s179 = sphi 0, %s178
      %s193 = sphi 0, %s179
      %s197 = sphi 0, %s197
      %s199 = sphi 0, %s197
      %s200 = sphi 0, %s199
      %s214 = sphi 0, %s200
      %s218 = sphi 0, %s218
      %s220 = sphi 0, %s218
      %s221 = sphi 0, %s220
      %s235 = sphi 0, %s221
      %s239 = sphi 0, %s239
      %s241 = sphi 0, %s239
      %s242 = sphi 0, %s241
      %s256 = sphi 0, %s242
      %s260 = sphi 0, %s260
      %s262 = sphi 0, %s260
      %s263 = sphi 0, %s262
      %s277 = sphi 0, %s263
      %s281 = sphi 0, %s281
      %s283 = sphi 0, %s281
      %s284 = sphi 0, %s283
      %s298 = sphi 0, %s284
      %s302 = sphi 0, %s302
      %s304 = sphi 0, %s302
      %s305 = sphi 0, %s304
      %s319 = sphi 0, %s305
      %s325 = sphi 0, %s327
      %s328 = sphi 0, %s325
      %s329 = sphi 0, %s328
      %s345 = sphi 0, %s329
      %s351 = sphi 0, %s353
      %s354 = sphi 0, %s351
      %s355 = sphi 0, %s354
      %s371 = sphi 0, %s355
      %s377 = sphi 0, %s379
      %s380 = sphi 0, %s377
      %s381 = sphi 0, %s380
      %s397 = sphi 0, %s381
      %s403 = sphi 0, %s405
      %s406 = sphi 0, %s403
      %s407 = sphi 0, %s406
      %s423 = sphi 0, %s407
    $region4: #{mavln_forward.1} parent=1 // loop_header_branch
      %35 = sbr.rel (%p33) target = $region8
    $region5: #{mavln_forward.1} parent=1 // loop_body
      %s37 = ssub.s32 %s32, 1
      %s38 = ssub.s32 %s32, 2
      %s39 = sadd.s32 %s32, 1
      %s40 = ssub.s32 %s32, %s39
      %p41 = scmp.eq.s32.totalorder %s40, 0
      %s43 = sadd.s32 %s42, 1
      %s44 = scalar_select %p41, %s42, %s43
      %p47 = pneg %p41
      %p48 = scmp.eq.s32.totalorder %s32, 3
      %p49 = por %p47, %p48
      %p50 = scmp.ne.s32.totalorder %s42, %s45
      %p51 = scmp.eq.s32.totalorder %s32, 0
      %p52 = por %p50, %p51
      %p53 = scmp.ne.s32.totalorder %s42, %s45
      %p54 = scmp.eq.s32.totalorder %s37, 3
      %p55 = por %p53, %p54
      %p56 = scmp.ne.s32.totalorder %s45, %s46
      %p57 = scmp.eq.s32.totalorder %s37, 0
      %p58 = por %p56, %p57
      %p59 = scmp.ne.s32.totalorder %s45, %s46
      %p60 = scmp.eq.s32.totalorder %s38, 3
      %p61 = por %p59, %p60
      %p63 = scmp.ne.s32.totalorder %s46, %s62
      %p64 = scmp.eq.s32.totalorder %s38, 0
      %p65 = por %p63, %p64
      %s66 = ssub.s32 %s32, %s39
      %p67 = scmp.eq.s32.totalorder %s66, 0
      %s69 = sadd.s32 %s68, 1
      %s70 = scalar_select %p67, %s68, %s69
      %p73 = pneg %p67
      %p74 = scmp.eq.s32.totalorder %s32, 3
      %p75 = por %p73, %p74
      %p76 = scmp.ne.s32.totalorder %s68, %s71
      %p77 = scmp.eq.s32.totalorder %s32, 0
      %p78 = por %p76, %p77
      %p79 = scmp.ne.s32.totalorder %s68, %s71
      %p80 = scmp.eq.s32.totalorder %s37, 3
      %p81 = por %p79, %p80
      %p82 = scmp.ne.s32.totalorder %s71, %s72
      %p83 = scmp.eq.s32.totalorder %s37, 0
      %p84 = por %p82, %p83
      %p85 = scmp.ne.s32.totalorder %s71, %s72
      %p86 = scmp.eq.s32.totalorder %s38, 3
      %p87 = por %p85, %p86
      %p89 = scmp.ne.s32.totalorder %s72, %s88
      %p90 = scmp.eq.s32.totalorder %s38, 0
      %p91 = por %p89, %p90
      %s93 = sadd.s32 %s92, 1
      %p96 = scmp.eq.s32.totalorder %s32, 3
      %p97 = scmp.ne.s32.totalorder %s92, %s94
      %p98 = scmp.eq.s32.totalorder %s32, 0
      %p99 = por %p97, %p98
      %p100 = scmp.ne.s32.totalorder %s92, %s94
      %p101 = scmp.eq.s32.totalorder %s37, 3
      %p102 = por %p100, %p101
      %p103 = scmp.ne.s32.totalorder %s94, %s95
      %p104 = scmp.eq.s32.totalorder %s37, 0
      %p105 = por %p103, %p104
      %p106 = scmp.ne.s32.totalorder %s94, %s95
      %p107 = scmp.eq.s32.totalorder %s38, 3
      %p108 = por %p106, %p107
      %p110 = scmp.ne.s32.totalorder %s95, %s109
      %p111 = scmp.eq.s32.totalorder %s38, 0
      %p112 = por %p110, %p111
      %s114 = sadd.s32 %s113, 1
      %p117 = scmp.eq.s32.totalorder %s32, 3
      %p118 = scmp.ne.s32.totalorder %s113, %s115
      %p119 = scmp.eq.s32.totalorder %s32, 0
      %p120 = por %p118, %p119
      %p121 = scmp.ne.s32.totalorder %s113, %s115
      %p122 = scmp.eq.s32.totalorder %s37, 3
      %p123 = por %p121, %p122
      %p124 = scmp.ne.s32.totalorder %s115, %s116
      %p125 = scmp.eq.s32.totalorder %s37, 0
      %p126 = por %p124, %p125
      %p127 = scmp.ne.s32.totalorder %s115, %s116
      %p128 = scmp.eq.s32.totalorder %s38, 3
      %p129 = por %p127, %p128
      %p131 = scmp.ne.s32.totalorder %s116, %s130
      %p132 = scmp.eq.s32.totalorder %s38, 0
      %p133 = por %p131, %p132
      %s135 = sadd.s32 %s134, 1
      %p138 = scmp.eq.s32.totalorder %s32, 3
      %p139 = scmp.ne.s32.totalorder %s134, %s136
      %p140 = scmp.eq.s32.totalorder %s32, 0
      %p141 = por %p139, %p140
      %p142 = scmp.ne.s32.totalorder %s134, %s136
      %p143 = scmp.eq.s32.totalorder %s37, 3
      %p144 = por %p142, %p143
      %p145 = scmp.ne.s32.totalorder %s136, %s137
      %p146 = scmp.eq.s32.totalorder %s37, 0
      %p147 = por %p145, %p146
      %p148 = scmp.ne.s32.totalorder %s136, %s137
      %p149 = scmp.eq.s32.totalorder %s38, 3
      %p150 = por %p148, %p149
      %p152 = scmp.ne.s32.totalorder %s137, %s151
      %p153 = scmp.eq.s32.totalorder %s38, 0
      %p154 = por %p152, %p153
      %s156 = sadd.s32 %s155, 1
      %p159 = scmp.eq.s32.totalorder %s32, 3
      %p160 = scmp.ne.s32.totalorder %s155, %s157
      %p161 = scmp.eq.s32.totalorder %s32, 0
      %p162 = por %p160, %p161
      %p163 = scmp.ne.s32.totalorder %s155, %s157
      %p164 = scmp.eq.s32.totalorder %s37, 3
      %p165 = por %p163, %p164
      %p166 = scmp.ne.s32.totalorder %s157, %s158
      %p167 = scmp.eq.s32.totalorder %s37, 0
      %p168 = por %p166, %p167
      %p169 = scmp.ne.s32.totalorder %s157, %s158
      %p170 = scmp.eq.s32.totalorder %s38, 3
      %p171 = por %p169, %p170
      %p173 = scmp.ne.s32.totalorder %s158, %s172
      %p174 = scmp.eq.s32.totalorder %s38, 0
      %p175 = por %p173, %p174
      %s177 = sadd.s32 %s176, 1
      %p180 = scmp.eq.s32.totalorder %s32, 3
      %p181 = scmp.ne.s32.totalorder %s176, %s178
      %p182 = scmp.eq.s32.totalorder %s32, 0
      %p183 = por %p181, %p182
      %p184 = scmp.ne.s32.totalorder %s176, %s178
      %p185 = scmp.eq.s32.totalorder %s37, 3
      %p186 = por %p184, %p185
      %p187 = scmp.ne.s32.totalorder %s178, %s179
      %p188 = scmp.eq.s32.totalorder %s37, 0
      %p189 = por %p187, %p188
      %p190 = scmp.ne.s32.totalorder %s178, %s179
      %p191 = scmp.eq.s32.totalorder %s38, 3
      %p192 = por %p190, %p191
      %p194 = scmp.ne.s32.totalorder %s179, %s193
      %p195 = scmp.eq.s32.totalorder %s38, 0
      %p196 = por %p194, %p195
      %s198 = sadd.s32 %s197, 1
      %p201 = scmp.eq.s32.totalorder %s32, 3
      %p202 = scmp.ne.s32.totalorder %s197, %s199
      %p203 = scmp.eq.s32.totalorder %s32, 0
      %p204 = por %p202, %p203
      %p205 = scmp.ne.s32.totalorder %s197, %s199
      %p206 = scmp.eq.s32.totalorder %s37, 3
      %p207 = por %p205, %p206
      %p208 = scmp.ne.s32.totalorder %s199, %s200
      %p209 = scmp.eq.s32.totalorder %s37, 0
      %p210 = por %p208, %p209
      %p211 = scmp.ne.s32.totalorder %s199, %s200
      %p212 = scmp.eq.s32.totalorder %s38, 3
      %p213 = por %p211, %p212
      %p215 = scmp.ne.s32.totalorder %s200, %s214
      %p216 = scmp.eq.s32.totalorder %s38, 0
      %p217 = por %p215, %p216
      %s219 = sadd.s32 %s218, 1
      %p222 = scmp.eq.s32.totalorder %s32, 3
      %p223 = scmp.ne.s32.totalorder %s218, %s220
      %p224 = scmp.eq.s32.totalorder %s32, 0
      %p225 = por %p223, %p224
      %p226 = scmp.ne.s32.totalorder %s218, %s220
      %p227 = scmp.eq.s32.totalorder %s37, 3
      %p228 = por %p226, %p227
      %p229 = scmp.ne.s32.totalorder %s220, %s221
      %p230 = scmp.eq.s32.totalorder %s37, 0
      %p231 = por %p229, %p230
      %p232 = scmp.ne.s32.totalorder %s220, %s221
      %p233 = scmp.eq.s32.totalorder %s38, 3
      %p234 = por %p232, %p233
      %p236 = scmp.ne.s32.totalorder %s221, %s235
      %p237 = scmp.eq.s32.totalorder %s38, 0
      %p238 = por %p236, %p237
      %s240 = sadd.s32 %s239, 1
      %p243 = scmp.eq.s32.totalorder %s32, 3
      %p244 = scmp.ne.s32.totalorder %s239, %s241
      %p245 = scmp.eq.s32.totalorder %s32, 0
      %p246 = por %p244, %p245
      %p247 = scmp.ne.s32.totalorder %s239, %s241
      %p248 = scmp.eq.s32.totalorder %s37, 3
      %p249 = por %p247, %p248
      %p250 = scmp.ne.s32.totalorder %s241, %s242
      %p251 = scmp.eq.s32.totalorder %s37, 0
      %p252 = por %p250, %p251
      %p253 = scmp.ne.s32.totalorder %s241, %s242
      %p254 = scmp.eq.s32.totalorder %s38, 3
      %p255 = por %p253, %p254
      %p257 = scmp.ne.s32.totalorder %s242, %s256
      %p258 = scmp.eq.s32.totalorder %s38, 0
      %p259 = por %p257, %p258
      %s261 = sadd.s32 %s260, 1
      %p264 = scmp.eq.s32.totalorder %s32, 3
      %p265 = scmp.ne.s32.totalorder %s260, %s262
      %p266 = scmp.eq.s32.totalorder %s32, 0
      %p267 = por %p265, %p266
      %p268 = scmp.ne.s32.totalorder %s260, %s262
      %p269 = scmp.eq.s32.totalorder %s37, 3
      %p270 = por %p268, %p269
      %p271 = scmp.ne.s32.totalorder %s262, %s263
      %p272 = scmp.eq.s32.totalorder %s37, 0
      %p273 = por %p271, %p272
      %p274 = scmp.ne.s32.totalorder %s262, %s263
      %p275 = scmp.eq.s32.totalorder %s38, 3
      %p276 = por %p274, %p275
      %p278 = scmp.ne.s32.totalorder %s263, %s277
      %p279 = scmp.eq.s32.totalorder %s38, 0
      %p280 = por %p278, %p279
      %s282 = sadd.s32 %s281, 1
      %p285 = scmp.eq.s32.totalorder %s32, 3
      %p286 = scmp.ne.s32.totalorder %s281, %s283
      %p287 = scmp.eq.s32.totalorder %s32, 0
      %p288 = por %p286, %p287
      %p289 = scmp.ne.s32.totalorder %s281, %s283
      %p290 = scmp.eq.s32.totalorder %s37, 3
      %p291 = por %p289, %p290
      %p292 = scmp.ne.s32.totalorder %s283, %s284
      %p293 = scmp.eq.s32.totalorder %s37, 0
      %p294 = por %p292, %p293
      %p295 = scmp.ne.s32.totalorder %s283, %s284
      %p296 = scmp.eq.s32.totalorder %s38, 3
      %p297 = por %p295, %p296
      %p299 = scmp.ne.s32.totalorder %s284, %s298
      %p300 = scmp.eq.s32.totalorder %s38, 0
      %p301 = por %p299, %p300
      %s303 = sadd.s32 %s302, 1
      %p306 = scmp.eq.s32.totalorder %s32, 3
      %p307 = scmp.ne.s32.totalorder %s302, %s304
      %p308 = scmp.eq.s32.totalorder %s32, 0
      %p309 = por %p307, %p308
      %p310 = scmp.ne.s32.totalorder %s302, %s304
      %p311 = scmp.eq.s32.totalorder %s37, 3
      %p312 = por %p310, %p311
      %p313 = scmp.ne.s32.totalorder %s304, %s305
      %p314 = scmp.eq.s32.totalorder %s37, 0
      %p315 = por %p313, %p314
      %p316 = scmp.ne.s32.totalorder %s304, %s305
      %p317 = scmp.eq.s32.totalorder %s38, 3
      %p318 = por %p316, %p317
      %p320 = scmp.ne.s32.totalorder %s305, %s319
      %p321 = scmp.eq.s32.totalorder %s38, 0
      %p322 = por %p320, %p321
      %s323 = ssub.s32 %s32, %s39
      %p324 = scmp.eq.s32.totalorder %s323, 0
      %s326 = sadd.s32 %s325, 1
      %s327 = scalar_select %p324, %s325, %s326
      %p330 = pneg %p324
      %p331 = scmp.eq.s32.totalorder %s32, 3
      %p332 = por %p330, %p331
      %p333 = scmp.ne.s32.totalorder %s325, %s328
      %p334 = scmp.eq.s32.totalorder %s32, 0
      %p335 = por %p333, %p334
      %p336 = scmp.ne.s32.totalorder %s325, %s328
      %p337 = scmp.eq.s32.totalorder %s37, 3
      %p338 = por %p336, %p337
      %p339 = scmp.ne.s32.totalorder %s328, %s329
      %p340 = scmp.eq.s32.totalorder %s37, 0
      %p341 = por %p339, %p340
      %p342 = scmp.ne.s32.totalorder %s328, %s329
      %p343 = scmp.eq.s32.totalorder %s38, 3
      %p344 = por %p342, %p343
      %p346 = scmp.ne.s32.totalorder %s329, %s345
      %p347 = scmp.eq.s32.totalorder %s38, 0
      %p348 = por %p346, %p347
      %s349 = ssub.s32 %s32, %s39
      %p350 = scmp.eq.s32.totalorder %s349, 0
      %s352 = sadd.s32 %s351, 1
      %s353 = scalar_select %p350, %s351, %s352
      %p356 = pneg %p350
      %p357 = scmp.eq.s32.totalorder %s32, 3
      %p358 = por %p356, %p357
      %p359 = scmp.ne.s32.totalorder %s351, %s354
      %p360 = scmp.eq.s32.totalorder %s32, 0
      %p361 = por %p359, %p360
      %p362 = scmp.ne.s32.totalorder %s351, %s354
      %p363 = scmp.eq.s32.totalorder %s37, 3
      %p364 = por %p362, %p363
      %p365 = scmp.ne.s32.totalorder %s354, %s355
      %p366 = scmp.eq.s32.totalorder %s37, 0
      %p367 = por %p365, %p366
      %p368 = scmp.ne.s32.totalorder %s354, %s355
      %p369 = scmp.eq.s32.totalorder %s38, 3
      %p370 = por %p368, %p369
      %p372 = scmp.ne.s32.totalorder %s355, %s371
      %p373 = scmp.eq.s32.totalorder %s38, 0
      %p374 = por %p372, %p373
      %s375 = ssub.s32 %s32, %s39
      %p376 = scmp.eq.s32.totalorder %s375, 0
      %s378 = sadd.s32 %s377, 1
      %s379 = scalar_select %p376, %s377, %s378
      %p382 = pneg %p376
      %p383 = scmp.eq.s32.totalorder %s32, 3
      %p384 = por %p382, %p383
      %p385 = scmp.ne.s32.totalorder %s377, %s380
      %p386 = scmp.eq.s32.totalorder %s32, 0
      %p387 = por %p385, %p386
      %p388 = scmp.ne.s32.totalorder %s377, %s380
      %p389 = scmp.eq.s32.totalorder %s37, 3
      %p390 = por %p388, %p389
      %p391 = scmp.ne.s32.totalorder %s380, %s381
      %p392 = scmp.eq.s32.totalorder %s37, 0
      %p393 = por %p391, %p392
      %p394 = scmp.ne.s32.totalorder %s380, %s381
      %p395 = scmp.eq.s32.totalorder %s38, 3
      %p396 = por %p394, %p395
      %p398 = scmp.ne.s32.totalorder %s381, %s397
      %p399 = scmp.eq.s32.totalorder %s38, 0
      %p400 = por %p398, %p399
      %s401 = ssub.s32 %s32, %s39
      %p402 = scmp.eq.s32.totalorder %s401, 0
      %s404 = sadd.s32 %s403, 1
      %s405 = scalar_select %p402, %s403, %s404
      %p408 = pneg %p402
      %p409 = scmp.eq.s32.totalorder %s32, 3
      %p410 = por %p408, %p409
      %p411 = scmp.ne.s32.totalorder %s403, %s406
      %p412 = scmp.eq.s32.totalorder %s32, 0
      %p413 = por %p411, %p412
      %p414 = scmp.ne.s32.totalorder %s403, %s406
      %p415 = scmp.eq.s32.totalorder %s37, 3
      %p416 = por %p414, %p415
      %p417 = scmp.ne.s32.totalorder %s406, %s407
      %p418 = scmp.eq.s32.totalorder %s37, 0
      %p419 = por %p417, %p418
      %p420 = scmp.ne.s32.totalorder %s406, %s407
      %p421 = scmp.eq.s32.totalorder %s38, 3
      %p422 = por %p420, %p421
      %p424 = scmp.ne.s32.totalorder %s407, %s423
      %p425 = scmp.eq.s32.totalorder %s38, 0
      %p426 = por %p424, %p425
      %p427 = scmp.le.s32.totalorder 1, %s32
      %p428 = scmp.lt.s32.totalorder %s32, 5
      %p429 = pnand %p427, %p428
      %p430 = pneg %p429
      // Predicated region
      $region9: #{mavln_forward.1} parent=5 // pred_check
        _
      $region10: #{mavln_forward.1} parent=5 // pred_check_branch
        %432 = sbr.rel (%p429) target = $region12
      $region11: #{mavln_forward.1} parent=5 // pred_region
        %s433 = ssub.s32 %s32, 1
        // Predicated region
        $region13: #{mavln_forward.1} parent=11 // pred_check
          %p434 = pneg %p105
        $region14: #{mavln_forward.1} parent=11 // pred_check_branch
          %436 = sbr.rel (%p434) target = $region16
        $region15: #{mavln_forward.1} parent=11 // pred_region
          _
        $region16: #{mavln_forward.1} parent=11 // pred_fallthru
          _
        // Predicated region
        $region17: #{mavln_forward.1} parent=11 // pred_check
          %p437 = pneg %p126
        $region18: #{mavln_forward.1} parent=11 // pred_check_branch
          %439 = sbr.rel (%p437) target = $region20
        $region19: #{mavln_forward.1} parent=11 // pred_region
          _
        $region20: #{mavln_forward.1} parent=11 // pred_fallthru
          _
        // Predicated region
        $region21: #{mavln_forward.1} parent=11 // pred_check
          %p440 = pneg %p147
        $region22: #{mavln_forward.1} parent=11 // pred_check_branch
          %442 = sbr.rel (%p440) target = $region24
        $region23: #{mavln_forward.1} parent=11 // pred_region
          _
        $region24: #{mavln_forward.1} parent=11 // pred_fallthru
          _
        // Predicated region
        $region25: #{mavln_forward.1} parent=11 // pred_check
          %p443 = pneg %p168
        $region26: #{mavln_forward.1} parent=11 // pred_check_branch
          %445 = sbr.rel (%p443) target = $region28
        $region27: #{mavln_forward.1} parent=11 // pred_region
          _
        $region28: #{mavln_forward.1} parent=11 // pred_fallthru
          _
        // Predicated region
        $region29: #{mavln_forward.1} parent=11 // pred_check
          %p446 = pneg %p189
        $region30: #{mavln_forward.1} parent=11 // pred_check_branch
          %448 = sbr.rel (%p446) target = $region32
        $region31: #{mavln_forward.1} parent=11 // pred_region
          _
        $region32: #{mavln_forward.1} parent=11 // pred_fallthru
          _
        // Predicated region
        $region33: #{mavln_forward.1} parent=11 // pred_check
          %p449 = pneg %p210
        $region34: #{mavln_forward.1} parent=11 // pred_check_branch
          %451 = sbr.rel (%p449) target = $region36
        $region35: #{mavln_forward.1} parent=11 // pred_region
          _
        $region36: #{mavln_forward.1} parent=11 // pred_fallthru
          _
        // Predicated region
        $region37: #{mavln_forward.1} parent=11 // pred_check
          %p452 = pneg %p231
        $region38: #{mavln_forward.1} parent=11 // pred_check_branch
          %454 = sbr.rel (%p452) target = $region40
        $region39: #{mavln_forward.1} parent=11 // pred_region
          _
        $region40: #{mavln_forward.1} parent=11 // pred_fallthru
          _
        // Predicated region
        $region41: #{mavln_forward.1} parent=11 // pred_check
          %p455 = pneg %p252
        $region42: #{mavln_forward.1} parent=11 // pred_check_branch
          %457 = sbr.rel (%p455) target = $region44
        $region43: #{mavln_forward.1} parent=11 // pred_region
          _
        $region44: #{mavln_forward.1} parent=11 // pred_fallthru
          _
        // Predicated region
        $region45: #{mavln_forward.1} parent=11 // pred_check
          %p458 = pneg %p273
        $region46: #{mavln_forward.1} parent=11 // pred_check_branch
          %460 = sbr.rel (%p458) target = $region48
        $region47: #{mavln_forward.1} parent=11 // pred_region
          _
        $region48: #{mavln_forward.1} parent=11 // pred_fallthru
          _
        // Predicated region
        $region49: #{mavln_forward.1} parent=11 // pred_check
          %p461 = pneg %p294
        $region50: #{mavln_forward.1} parent=11 // pred_check_branch
          %463 = sbr.rel (%p461) target = $region52
        $region51: #{mavln_forward.1} parent=11 // pred_region
          _
        $region52: #{mavln_forward.1} parent=11 // pred_fallthru
          _
        // Predicated region
        $region53: #{mavln_forward.1} parent=11 // pred_check
          %p464 = pneg %p315
        $region54: #{mavln_forward.1} parent=11 // pred_check_branch
          %466 = sbr.rel (%p464) target = $region56
        $region55: #{mavln_forward.1} parent=11 // pred_region
          _
        $region56: #{mavln_forward.1} parent=11 // pred_fallthru
          _
      $region12: #{mavln_forward.1} parent=5 // pred_fallthru
        _
      %p467 = scmp.lt.s32.totalorder %s32, 4
      // Predicated region
      $region57: #{mavln_forward.1} parent=5 // pred_check
        %p468 = pneg %p467
      $region58: #{mavln_forward.1} parent=5 // pred_check_branch
        %470 = sbr.rel (%p468) target = $region60
      $region59: #{mavln_forward.1} parent=5 // pred_region
        // Predicated region
        $region61: #{mavln_forward.1} parent=59 // pred_check
          %p471 = pneg %p52
        $region62: #{mavln_forward.1} parent=59 // pred_check_branch
          %473 = sbr.rel (%p471) target = $region64
        $region63: #{mavln_forward.1} parent=59 // pred_region
          %p474 = scmp.lt.s32.totalorder %s32, 3
          %s475 = scalar_select %p474, %s32, 3
          %s476 = smul.addr %s475, 8
          %s477 = smul.addr %s476, 4
          %s478 = scalar_lea.vmem %s0, %s477
        $region64: #{mavln_forward.1} parent=59 // pred_fallthru
          _
        // Predicated region
        $region65: #{mavln_forward.1} parent=59 // pred_check
          %p479 = pneg %p78
        $region66: #{mavln_forward.1} parent=59 // pred_check_branch
          %481 = sbr.rel (%p479) target = $region68
        $region67: #{mavln_forward.1} parent=59 // pred_region
          %p482 = scmp.lt.s32.totalorder %s32, 3
          %s483 = scalar_select %p482, %s32, 3
          %s484 = smul.addr %s483, 8
          %s485 = scalar_lea.vmem %s1, %s484
        $region68: #{mavln_forward.1} parent=59 // pred_fallthru
          _
      $region60: #{mavln_forward.1} parent=5 // pred_fallthru
        _
      %p486 = scmp.le.s32.totalorder 1, %s32
      %p487 = scmp.lt.s32.totalorder %s32, 5
      %p488 = pnand %p486, %p487
      %p489 = pneg %p488
      // Predicated region
      $region69: #{mavln_forward.1} parent=5 // pred_check
        _
      $region70: #{mavln_forward.1} parent=5 // pred_check_branch
        %491 = sbr.rel (%p488) target = $region72
      $region71: #{mavln_forward.1} parent=5 // pred_region
        %s492 = ssub.s32 %s32, 1
        %p493 = scmp.lt.s32.totalorder %s37, 3
        %s494 = scalar_select %p493, %s37, 3
        %s495 = smul.addr %s494, 8
        %s496 = smul.addr %s495, 4
        %s497 = scalar_lea.vmem %s0, %s496
        %p498 = pneg %p58
        %p499 = pneg %p55
        %p500 = scmp.lt.s32.totalorder %s37, 3
        %s501 = scalar_select %p500, %s37, 3
        %s502 = smul.addr %s501, 8
        %s503 = scalar_lea.vmem %s1, %s502
        %p504 = pneg %p84
        %p505 = pneg %p81
        %p506 = pneg %p105
        %p507 = pneg %p102
        %p508 = pneg %p126
        %p509 = pneg %p123
        %p510 = pneg %p147
        %p511 = pneg %p144
        %p512 = pneg %p168
        %p513 = pneg %p165
        %p514 = pneg %p189
        %p515 = pneg %p186
        %p516 = pneg %p210
        %p517 = pneg %p207
        %p518 = pneg %p231
        %p519 = pneg %p228
        %p520 = pneg %p252
        %p521 = pneg %p249
        %p522 = pneg %p273
        %p523 = pneg %p270
        %p524 = pneg %p294
        %p525 = pneg %p291
        %p526 = pneg %p315
        %p527 = pneg %p312
        %p528 = pneg %p341
        %p529 = pneg %p338
        %s530 = sand.u32 %s328, 1
        %s531 = scalar_lea.sflag [#allocation3], %s530
        %s532 = sand.u32 %s328, 1
        %s533 = smul.addr %s532, 32
        %s534 = scalar_lea.vmem [#allocation2], %s533
        %p535 = pneg %p367
        %p536 = pneg %p364
        %s537 = sand.u32 %s37, 1
        %s538 = scalar_lea.sflag [#allocation5], %s537
        %s539 = sand.u32 %s354, 1
        %s540 = smul.addr %s539, 40
        %s541 = scalar_lea.vmem [#allocation4], %s540
        %p542 = pneg %p393
        %p543 = pneg %p390
        %s544 = sand.u32 %s37, 1
        %s545 = scalar_lea.sflag [#allocation5], %s544
        %s546 = sand.u32 %s380, 1
        %s547 = smul.addr %s546, 40
        %s548 = scalar_lea.vmem [#allocation6], %s547
        %p549 = pneg %p419
        %p550 = pneg %p416
        %s551 = sand.u32 %s406, 1
        %s552 = scalar_lea.sflag [#allocation8], %s551
        %s553 = sand.u32 %s406, 1
        %s554 = smul.addr %s553, 80
        %s555 = scalar_lea.vmem [#allocation7], %s554
        %p556 = scmp.lt.s32.totalorder %s37, 3
        %s557 = scalar_select %p556, %s37, 3
        %s558 = smul.addr %s557, 8
        %s559 = smul.addr %s558, 4
        %s560 = scalar_lea.vmem %s0, %s559
        %p561 = scmp.lt.s32.totalorder %s37, 3
        %s562 = scalar_select %p561, %s37, 3
        %s563 = smul.addr %s562, 8
        %s564 = scalar_lea.vmem %s1, %s563
        %v566 = vld [vmem:[%s560] sm:$0xff]
        %v567 = vld [vmem:[%s560 + $0x8] sm:$0xff]
        %v568 = vld [vmem:[%s560 + $0x10] sm:$0xff]
        %v569 = vld [vmem:[%s560 + $0x18] sm:$0xff]
        %v570 = vld [vmem:[%s2] sm:$0xff]
        %v571 = vld [vmem:[%s2 + $0x8] sm:$0xff]
        %v572 = vld [vmem:[%s2 + $0x10] sm:$0xff]
        %v573 = vld [vmem:[%s2 + $0x18] sm:$0xff]
        %v574 = vld [vmem:[%s2 + $0x20] sm:$0xff]
        %v575 = vld [vmem:[%s2 + $0x28] sm:$0xff]
        %v576 = vld [vmem:[%s2 + $0x30] sm:$0xff]
        %v577 = vld [vmem:[%s2 + $0x38] sm:$0xff]
        %v578 = vld [vmem:[%s2 + $0x40] sm:$0xff]
        %v579 = vld [vmem:[%s2 + $0x48] sm:$0xff]
        %v580 = vld [vmem:[%s2 + $0x50] sm:$0xff]
        %v581 = vld [vmem:[%s2 + $0x58] sm:$0xff]
        %v582 = vld [vmem:[%s2 + $0x60] sm:$0xff]
        %v583 = vld [vmem:[%s2 + $0x68] sm:$0xff]
        %v584 = vld [vmem:[%s2 + $0x70] sm:$0xff]
        %v585 = vld [vmem:[%s2 + $0x78] sm:$0xff]
        %v586 = vld [vmem:[%s2 + $0x80] sm:$0xff]
        %v587 = vld [vmem:[%s2 + $0x88] sm:$0xff]
        %v588 = vld [vmem:[%s2 + $0x90] sm:$0xff]
        %v589 = vld [vmem:[%s2 + $0x98] sm:$0xff]
        %v590 = vld [vmem:[%s2 + $0xa0] sm:$0xff]
        %v591 = vld [vmem:[%s2 + $0xa8] sm:$0xff]
        %v592 = vld [vmem:[%s2 + $0xb0] sm:$0xff]
        %v593 = vld [vmem:[%s2 + $0xb8] sm:$0xff]
        %v594 = vld [vmem:[%s3] sm:$0x3]
        %v596 = vperm.slane %v594, 0
        %v597 = vperm.slane %v594, 1
        %v604 = vunpack.c.l.b16 %v566
        %v605 = vunpack.c.h.b16 %v566
        %v606 = vunpack.c.l.b16 %v567
        %v607 = vunpack.c.h.b16 %v567
        %v608 = vunpack.c.l.b16 %v568
        %v609 = vunpack.c.h.b16 %v568
        %v610 = vunpack.c.l.b16 %v569
        %v611 = vunpack.c.h.b16 %v569
        %v612 = vpack.c.b16 %v606, %v604
        %v613 = vpack.c.b16 %v607, %v605
        %v614 = vpack.c.b16 %v610, %v608
        %v615 = vpack.c.b16 %v611, %v609
        %v642 = vunpack.c.l.b16 %v570
        %v643 = vunpack.c.h.b16 %v570
        %v644 = vunpack.c.l.b16 %v571
        %v645 = vunpack.c.h.b16 %v571
        %v646 = vunpack.c.l.b16 %v572
        %v647 = vunpack.c.h.b16 %v572
        %v648 = vunpack.c.l.b16 %v573
        %v649 = vunpack.c.h.b16 %v573
        %v650 = vunpack.c.l.b16 %v574
        %v651 = vunpack.c.h.b16 %v574
        %v652 = vunpack.c.l.b16 %v575
        %v653 = vunpack.c.h.b16 %v575
        %v654 = vunpack.c.l.b16 %v576
        %v655 = vunpack.c.h.b16 %v576
        %v656 = vunpack.c.l.b16 %v577
        %v657 = vunpack.c.h.b16 %v577
        %v658 = vunpack.c.l.b16 %v578
        %v659 = vunpack.c.h.b16 %v578
        %v660 = vunpack.c.l.b16 %v579
        %v661 = vunpack.c.h.b16 %v579
        %v662 = vunpack.c.l.b16 %v580
        %v663 = vunpack.c.h.b16 %v580
        %v664 = vunpack.c.l.b16 %v581
        %v665 = vunpack.c.h.b16 %v581
        %v666 = vunpack.c.l.b16 %v582
        %v667 = vunpack.c.h.b16 %v582
        %v668 = vunpack.c.l.b16 %v583
        %v669 = vunpack.c.h.b16 %v583
        %v670 = vunpack.c.l.b16 %v584
        %v671 = vunpack.c.h.b16 %v584
        %v672 = vunpack.c.l.b16 %v585
        %v673 = vunpack.c.h.b16 %v585
        %v674 = vunpack.c.l.b16 %v586
        %v675 = vunpack.c.h.b16 %v586
        %v676 = vunpack.c.l.b16 %v587
        %v677 = vunpack.c.h.b16 %v587
        %v678 = vunpack.c.l.b16 %v588
        %v679 = vunpack.c.h.b16 %v588
        %v680 = vunpack.c.l.b16 %v589
        %v681 = vunpack.c.h.b16 %v589
        %v682 = vunpack.c.l.b16 %v590
        %v683 = vunpack.c.h.b16 %v590
        %v684 = vunpack.c.l.b16 %v591
        %v685 = vunpack.c.h.b16 %v591
        %v686 = vunpack.c.l.b16 %v592
        %v687 = vunpack.c.h.b16 %v592
        %v688 = vunpack.c.l.b16 %v593
        %v689 = vunpack.c.h.b16 %v593
        %v690 = vpack.c.b16 %v644, %v642
        %v691 = vpack.c.b16 %v645, %v643
        %v692 = vpack.c.b16 %v648, %v646
        %v693 = vpack.c.b16 %v649, %v647
        %v694 = vpack.c.b16 %v652, %v650
        %v695 = vpack.c.b16 %v653, %v651
        %v696 = vpack.c.b16 %v656, %v654
        %v697 = vpack.c.b16 %v657, %v655
        %v698 = vpack.c.b16 %v660, %v658
        %v699 = vpack.c.b16 %v661, %v659
        %v700 = vpack.c.b16 %v664, %v662
        %v701 = vpack.c.b16 %v665, %v663
        %v702 = vpack.c.b16 %v668, %v666
        %v703 = vpack.c.b16 %v669, %v667
        %v704 = vpack.c.b16 %v672, %v670
        %v705 = vpack.c.b16 %v673, %v671
        %v706 = vpack.c.b16 %v676, %v674
        %v707 = vpack.c.b16 %v677, %v675
        %v708 = vpack.c.b16 %v680, %v678
        %v709 = vpack.c.b16 %v681, %v679
        %v710 = vpack.c.b16 %v684, %v682
        %v711 = vpack.c.b16 %v685, %v683
        %v712 = vpack.c.b16 %v688, %v686
        %v713 = vpack.c.b16 %v689, %v687
        %vm738 = vcmask 523264
        %v740 = vsel %vm738, %v613, 0
        %v743 = vsel %vm738, %v615, 0
        %745 = vmatpush.bf16.msra.mxu0 %v704
        %746 = vmatpush.bf16.msra.mxu0 %v702
        %747 = vmatpush.bf16.msra.mxu0 %v700
        %748 = vmatpush.bf16.msra.mxu0 %v698
        %749 = vmatpush.bf16.msra.mxu0 %v696
        %750 = vmatpush.bf16.msra.mxu0 %v694
        %751 = vmatpush.bf16.msra.mxu0 %v692
        %752 = vmatpush.bf16.msra.mxu0 %v690
        %753 = vmatmul.bf16.gmra.mxu0 %v612
        %v754 = vpop.f32.mrf.mxu0
        %v755 = vadd.f32 %v596, %v754
        %v756 = vpop.f32.mrf.mxu0
        %v757 = vadd.f32 %v596, %v756
        %758 = vmatmul.bf16.gmra.mxu0 %v614
        %v759 = vpop.f32.mrf.mxu0
        %v760 = vadd.f32 %v596, %v759
        %v761 = vpop.f32.mrf.mxu0
        %v762 = vadd.f32 %v596, %v761
        %763 = vdwg.mxu0
        %764 = vmatpush.bf16.msra.mxu0 0
        %765 = vmatpush.bf16.msra.mxu0 0
        %766 = vmatpush.bf16.msra.mxu0 0
        %767 = vmatpush.bf16.msra.mxu0 0
        %768 = vmatpush.bf16.msra.mxu0 %v712
        %769 = vmatpush.bf16.msra.mxu0 %v710
        %770 = vmatpush.bf16.msra.mxu0 %v708
        %771 = vmatpush.bf16.msra.mxu0 %v706
        %772 = vmatmul.bf16.gmra.mxu0 %v740
        %v773 = vpop.f32.mrf.mxu0
        %v774 = vadd.f32 %v755, %v773
        %v775 = vpop.f32.mrf.mxu0
        %v776 = vadd.f32 %v757, %v775
        %777 = vmatmul.bf16.gmra.mxu0 %v743
        %v778 = vpop.f32.mrf.mxu0
        %v779 = vadd.f32 %v760, %v778
        %v780 = vpop.f32.mrf.mxu0
        %v781 = vadd.f32 %v762, %v780
        %782 = vdwg.mxu0
        %783 = vmatpush.bf16.msra.mxu0 %v705
        %784 = vmatpush.bf16.msra.mxu0 %v703
        %785 = vmatpush.bf16.msra.mxu0 %v701
        %786 = vmatpush.bf16.msra.mxu0 %v699
        %787 = vmatpush.bf16.msra.mxu0 %v697
        %788 = vmatpush.bf16.msra.mxu0 %v695
        %789 = vmatpush.bf16.msra.mxu0 %v693
        %790 = vmatpush.bf16.msra.mxu0 %v691
        %791 = vmatmul.bf16.gmra.mxu0 %v612
        %v792 = vpop.f32.mrf.mxu0
        %v793 = vadd.f32 %v597, %v792
        %v794 = vpop.f32.mrf.mxu0
        %v795 = vadd.f32 %v597, %v794
        %796 = vmatmul.bf16.gmra.mxu0 %v614
        %v797 = vpop.f32.mrf.mxu0
        %v798 = vadd.f32 %v597, %v797
        %v799 = vpop.f32.mrf.mxu0
        %v800 = vadd.f32 %v597, %v799
        %801 = vdwg.mxu0
        %802 = vmatpush.bf16.msra.mxu0 0
        %803 = vmatpush.bf16.msra.mxu0 0
        %804 = vmatpush.bf16.msra.mxu0 0
        %805 = vmatpush.bf16.msra.mxu0 0
        %806 = vmatpush.bf16.msra.mxu0 %v713
        %807 = vmatpush.bf16.msra.mxu0 %v711
        %808 = vmatpush.bf16.msra.mxu0 %v709
        %809 = vmatpush.bf16.msra.mxu0 %v707
        %810 = vmatmul.bf16.gmra.mxu0 %v740
        %v811 = vpop.f32.mrf.mxu0
        %v812 = vadd.f32 %v793, %v811
        %v813 = vpop.f32.mrf.mxu0
        %v814 = vadd.f32 %v795, %v813
        %815 = vmatmul.bf16.gmra.mxu0 %v743
        %v816 = vpop.f32.mrf.mxu0
        %v817 = vadd.f32 %v798, %v816
        %v818 = vpop.f32.mrf.mxu0
        %v819 = vadd.f32 %v800, %v818
        %820 = vdwg.mxu0
        %821 = vst [vmem:[%s534] sm:$0xff] %v774
        %822 = vst [vmem:[%s534 + $0x8] sm:$0xff] %v776
        %823 = vst [vmem:[%s534 + $0x10] sm:$0xff] %v779
        %824 = vst [vmem:[%s534 + $0x18] sm:$0xff] %v781
        %v825 = vld [vmem:[%s564] sm:$0xff]
        %v826 = vlaneseq
        %v827 = vand.u32 %v826, 127
        %v828 = vadd.s32 %v827, 128
        %829 = vset.pattern.permute.xlu0 0
        %830 = vperm.xlu0 %829, %v825
        %v831 = vpop.permute.xlu0 %830
        %vm832 = vcmp.eq.s32.totalorder %v827, %v831
        %vm833 = vcmp.eq.s32.totalorder %v828, %v831
        %v834 = vsel %vm832, 1, 0
        %v835 = vsel %vm833, 1, 0
        %v836 = vcvt.s32.f32 %v834
        %v837 = vcvt.s32.f32 %v835
        %v838 = vld [vmem:[%s4] sm:$0xff]
        %v839 = vld [vmem:[%s4 + $0x8] sm:$0xff]
        %v840 = vld [vmem:[%s4 + $0x10] sm:$0xff]
        %v841 = vld [vmem:[%s4 + $0x18] sm:$0xff]
        %v842 = vld [vmem:[%s4 + $0x20] sm:$0xff]
        %v843 = vld [vmem:[%s4 + $0x28] sm:$0xff]
        %v844 = vld [vmem:[%s4 + $0x30] sm:$0xff]
        %v845 = vld [vmem:[%s4 + $0x38] sm:$0xff]
        %v846 = vld [vmem:[%s4 + $0x40] sm:$0xff]
        %v847 = vld [vmem:[%s4 + $0x48] sm:$0xff]
        %v848 = vld [vmem:[%s4 + $0x50] sm:$0xff]
        %v849 = vld [vmem:[%s4 + $0x58] sm:$0xff]
        %v850 = vld [vmem:[%s4 + $0x60] sm:$0xff]
        %v851 = vld [vmem:[%s4 + $0x68] sm:$0xff]
        %v852 = vld [vmem:[%s4 + $0x70] sm:$0xff]
        %v853 = vld [vmem:[%s4 + $0x78] sm:$0xff]
        %v854 = vld [vmem:[%s4 + $0x80] sm:$0xff]
        %v855 = vld [vmem:[%s4 + $0x88] sm:$0xff]
        %v856 = vld [vmem:[%s4 + $0x90] sm:$0xff]
        %v857 = vld [vmem:[%s4 + $0x98] sm:$0xff]
        %v858 = vld [vmem:[%s4 + $0xa0] sm:$0xff]
        %v859 = vld [vmem:[%s4 + $0xa8] sm:$0xff]
        %v860 = vld [vmem:[%s4 + $0xb0] sm:$0xff]
        %v861 = vld [vmem:[%s4 + $0xb8] sm:$0xff]
        %v862 = vld [vmem:[%s4 + $0xc0] sm:$0xff]
        %v863 = vld [vmem:[%s4 + $0xc8] sm:$0xff]
        %v864 = vld [vmem:[%s4 + $0xd0] sm:$0xff]
        %v865 = vld [vmem:[%s4 + $0xd8] sm:$0xff]
        %v866 = vld [vmem:[%s4 + $0xe0] sm:$0xff]
        %v867 = vld [vmem:[%s4 + $0xe8] sm:$0xff]
        %v868 = vld [vmem:[%s4 + $0xf0] sm:$0xff]
        %v869 = vld [vmem:[%s4 + $0xf8] sm:$0xff]
        %870 = vmatpush.msra.mxu0 %v853
        %871 = vmatpush.msra.mxu0 %v852
        %872 = vmatpush.msra.mxu0 %v851
        %873 = vmatpush.msra.mxu0 %v850
        %874 = vmatpush.msra.mxu0 %v849
        %875 = vmatpush.msra.mxu0 %v848
        %876 = vmatpush.msra.mxu0 %v847
        %877 = vmatpush.msra.mxu0 %v846
        %878 = vmatpush.msra.mxu0 %v845
        %879 = vmatpush.msra.mxu0 %v844
        %880 = vmatpush.msra.mxu0 %v843
        %881 = vmatpush.msra.mxu0 %v842
        %882 = vmatpush.msra.mxu0 %v841
        %883 = vmatpush.msra.mxu0 %v840
        %884 = vmatpush.msra.mxu0 %v839
        %885 = vmatpush.msra.mxu0 %v838
        %886 = vmatmul.f32.gmra.mxu0 %v836
        %v887 = vpop.f32.mrf.mxu0
        %v888 = vadd.f32 0.0, %v887
        %889 = vdwg.mxu0
        %890 = vmatpush.msra.mxu0 %v869
        %891 = vmatpush.msra.mxu0 %v868
        %892 = vmatpush.msra.mxu0 %v867
        %893 = vmatpush.msra.mxu0 %v866
        %894 = vmatpush.msra.mxu0 %v865
        %895 = vmatpush.msra.mxu0 %v864
        %896 = vmatpush.msra.mxu0 %v863
        %897 = vmatpush.msra.mxu0 %v862
        %898 = vmatpush.msra.mxu0 %v861
        %899 = vmatpush.msra.mxu0 %v860
        %900 = vmatpush.msra.mxu0 %v859
        %901 = vmatpush.msra.mxu0 %v858
        %902 = vmatpush.msra.mxu0 %v857
        %903 = vmatpush.msra.mxu0 %v856
        %904 = vmatpush.msra.mxu0 %v855
        %905 = vmatpush.msra.mxu0 %v854
        %906 = vmatmul.f32.gmra.mxu0 %v837
        %v907 = vpop.f32.mrf.mxu0
        %v908 = vadd.f32 %v888, %v907
        %909 = vdwg.mxu0
        %910 = vst [vmem:[%s541] sm:$0xff] %v812
        %911 = vst [vmem:[%s541 + $0x8] sm:$0xff] %v814
        %912 = vst [vmem:[%s541 + $0x10] sm:$0xff] %v817
        %913 = vst [vmem:[%s541 + $0x18] sm:$0xff] %v819
        %914 = vst [vmem:[%s541 + $0x20] sm:$0xff] %v908
        %v915 = vmul.f32 %v812, %v812
        %v916 = vmul.f32 %v814, %v814
        %v917 = vmul.f32 %v817, %v817
        %v918 = vmul.f32 %v819, %v819
        %v919 = vmul.f32 %v908, %v908
        %920 = vadd.xlane.f32.xlu0 %v915
        %v921 = vpop.xlane.xlu0 %920
        %922 = vadd.xlane.f32.xlu0 %v916
        %v923 = vpop.xlane.xlu0 %922
        %924 = vadd.xlane.f32.xlu0 %v917
        %v925 = vpop.xlane.xlu0 %924
        %926 = vadd.xlane.f32.xlu0 %v918
        %v927 = vpop.xlane.xlu0 %926
        %928 = vadd.xlane.f32.xlu0 %v919
        %v929 = vpop.xlane.xlu0 %928
        %v930 = vrcp.pop 128.0
        %v931 = vmul.f32 128.0, %v930
        %v932 = vsub.f32 1.0, %v931
        %v933 = vmul.f32 %v930, %v932
        %v934 = vadd.f32 %v930, %v933
        %vm935 = vweird.f32 %v930
        %v936 = vsel %vm935, %v930, %v934
        %v937 = vmul.f32 %v921, %v936
        %v938 = vmul.f32 %v923, %v936
        %v939 = vmul.f32 %v925, %v936
        %v940 = vmul.f32 %v927, %v936
        %v941 = vmul.f32 %v929, %v936
        %v942 = vadd.f32 %v937, 1e-06
        %v943 = vadd.f32 %v938, 1e-06
        %v944 = vadd.f32 %v939, 1e-06
        %v945 = vadd.f32 %v940, 1e-06
        %v946 = vadd.f32 %v941, 1e-06
        %v947 = vrsqrt.pop %v942
        %v948 = vmul.f32 %v947, %v942
        %v949 = vmul.f32 %v948, %v947
        %v950 = vmul.f32 0.5, %v949
        %v951 = vsub.f32 1.5, %v950
        %v952 = vmul.f32 %v947, %v951
        %vm953 = vweird.f32 %v942
        %vm954 = vweird.f32 %v947
        %vm955 = vmor %vm953, %vm954
        %v956 = vsel %vm955, %v947, %v952
        %v957 = vrsqrt.pop %v943
        %v958 = vmul.f32 %v957, %v943
        %v959 = vmul.f32 %v958, %v957
        %v960 = vmul.f32 0.5, %v959
        %v961 = vsub.f32 1.5, %v960
        %v962 = vmul.f32 %v957, %v961
        %vm963 = vweird.f32 %v943
        %vm964 = vweird.f32 %v957
        %vm965 = vmor %vm963, %vm964
        %v966 = vsel %vm965, %v957, %v962
        %v967 = vrsqrt.pop %v944
        %v968 = vmul.f32 %v967, %v944
        %v969 = vmul.f32 %v968, %v967
        %v970 = vmul.f32 0.5, %v969
        %v971 = vsub.f32 1.5, %v970
        %v972 = vmul.f32 %v967, %v971
        %vm973 = vweird.f32 %v944
        %vm974 = vweird.f32 %v967
        %vm975 = vmor %vm973, %vm974
        %v976 = vsel %vm975, %v967, %v972
        %v977 = vrsqrt.pop %v945
        %v978 = vmul.f32 %v977, %v945
        %v979 = vmul.f32 %v978, %v977
        %v980 = vmul.f32 0.5, %v979
        %v981 = vsub.f32 1.5, %v980
        %v982 = vmul.f32 %v977, %v981
        %vm983 = vweird.f32 %v945
        %vm984 = vweird.f32 %v977
        %vm985 = vmor %vm983, %vm984
        %v986 = vsel %vm985, %v977, %v982
        %v987 = vrsqrt.pop %v946
        %v988 = vmul.f32 %v987, %v946
        %v989 = vmul.f32 %v988, %v987
        %v990 = vmul.f32 0.5, %v989
        %v991 = vsub.f32 1.5, %v990
        %v992 = vmul.f32 %v987, %v991
        %vm993 = vweird.f32 %v946
        %vm994 = vweird.f32 %v987
        %vm995 = vmor %vm993, %vm994
        %v996 = vsel %vm995, %v987, %v992
        %v997 = vmul.f32 %v812, %v956
        %v998 = vmul.f32 %v814, %v966
        %v999 = vmul.f32 %v817, %v976
        %v1000 = vmul.f32 %v819, %v986
        %v1001 = vmul.f32 %v908, %v996
        %v1002 = vpack.c.bf16 %v998, %v997
        %v1003 = vpack.c.bf16 %v1000, %v999
        %v1004 = vpack.c.bf16 %v1001, %v1001
        %v1005 = vld [vmem:[%s5] sm:$0xff]
        %v1006 = vld [vmem:[%s5 + $0x8] sm:$0xf]
        %v1007 = vld [vmem:[%s5 + $0xc] sm:$0xff]
        %v1008 = vld [vmem:[%s5 + $0x14] sm:$0xf]
        %v1009 = vld [vmem:[%s5 + $0x18] sm:$0xff]
        %v1010 = vld [vmem:[%s5 + $0x20] sm:$0xf]
        %v1011 = vld [vmem:[%s5 + $0x24] sm:$0xff]
        %v1012 = vld [vmem:[%s5 + $0x2c] sm:$0xf]
        %v1013 = vld [vmem:[%s5 + $0x30] sm:$0xff]
        %v1014 = vld [vmem:[%s5 + $0x38] sm:$0xf]
        %v1015 = vld [vmem:[%s5 + $0x3c] sm:$0xff]
        %v1016 = vld [vmem:[%s5 + $0x44] sm:$0xf]
        %v1017 = vld [vmem:[%s5 + $0x48] sm:$0xff]
        %v1018 = vld [vmem:[%s5 + $0x50] sm:$0xf]
        %v1019 = vld [vmem:[%s5 + $0x54] sm:$0xff]
        %v1020 = vld [vmem:[%s5 + $0x5c] sm:$0xf]
        %v1021 = vld [vmem:[%s5 + $0x60] sm:$0xff]
        %v1022 = vld [vmem:[%s5 + $0x68] sm:$0xf]
        %v1023 = vld [vmem:[%s5 + $0x6c] sm:$0xff]
        %v1024 = vld [vmem:[%s5 + $0x74] sm:$0xf]
        %v1025 = vld [vmem:[%s5 + $0x78] sm:$0xff]
        %v1026 = vld [vmem:[%s5 + $0x80] sm:$0xf]
        %v1027 = vld [vmem:[%s5 + $0x84] sm:$0xff]
        %v1028 = vld [vmem:[%s5 + $0x8c] sm:$0xf]
        %v1029 = vld [vmem:[%s5 + $0x90] sm:$0xff]
        %v1030 = vld [vmem:[%s5 + $0x98] sm:$0xf]
        %v1031 = vld [vmem:[%s5 + $0x9c] sm:$0xff]
        %v1032 = vld [vmem:[%s5 + $0xa4] sm:$0xf]
        %v1033 = vld [vmem:[%s5 + $0xa8] sm:$0xff]
        %v1034 = vld [vmem:[%s5 + $0xb0] sm:$0xf]
        %v1035 = vld [vmem:[%s5 + $0xb4] sm:$0xff]
        %v1036 = vld [vmem:[%s5 + $0xbc] sm:$0xf]
        %v1069 = vunpack.c.l.b16 %v1005
        %v1070 = vunpack.c.h.b16 %v1005
        %v1071 = vunpack.c.l.b16 %v1006
        %v1072 = vunpack.c.l.b16 %v1007
        %v1073 = vunpack.c.h.b16 %v1007
        %v1074 = vunpack.c.l.b16 %v1008
        %v1075 = vunpack.c.l.b16 %v1009
        %v1076 = vunpack.c.h.b16 %v1009
        %v1077 = vunpack.c.l.b16 %v1010
        %v1078 = vunpack.c.l.b16 %v1011
        %v1079 = vunpack.c.h.b16 %v1011
        %v1080 = vunpack.c.l.b16 %v1012
        %v1081 = vunpack.c.l.b16 %v1013
        %v1082 = vunpack.c.h.b16 %v1013
        %v1083 = vunpack.c.l.b16 %v1014
        %v1084 = vunpack.c.l.b16 %v1015
        %v1085 = vunpack.c.h.b16 %v1015
        %v1086 = vunpack.c.l.b16 %v1016
        %v1087 = vunpack.c.l.b16 %v1017
        %v1088 = vunpack.c.h.b16 %v1017
        %v1089 = vunpack.c.l.b16 %v1018
        %v1090 = vunpack.c.l.b16 %v1019
        %v1091 = vunpack.c.h.b16 %v1019
        %v1092 = vunpack.c.l.b16 %v1020
        %v1093 = vunpack.c.l.b16 %v1021
        %v1094 = vunpack.c.h.b16 %v1021
        %v1095 = vunpack.c.l.b16 %v1022
        %v1096 = vunpack.c.l.b16 %v1023
        %v1097 = vunpack.c.h.b16 %v1023
        %v1098 = vunpack.c.l.b16 %v1024
        %v1099 = vunpack.c.l.b16 %v1025
        %v1100 = vunpack.c.h.b16 %v1025
        %v1101 = vunpack.c.l.b16 %v1026
        %v1102 = vunpack.c.l.b16 %v1027
        %v1103 = vunpack.c.h.b16 %v1027
        %v1104 = vunpack.c.l.b16 %v1028
        %v1105 = vunpack.c.l.b16 %v1029
        %v1106 = vunpack.c.h.b16 %v1029
        %v1107 = vunpack.c.l.b16 %v1030
        %v1108 = vunpack.c.l.b16 %v1031
        %v1109 = vunpack.c.h.b16 %v1031
        %v1110 = vunpack.c.l.b16 %v1032
        %v1111 = vunpack.c.l.b16 %v1033
        %v1112 = vunpack.c.h.b16 %v1033
        %v1113 = vunpack.c.l.b16 %v1034
        %v1114 = vunpack.c.l.b16 %v1035
        %v1115 = vunpack.c.h.b16 %v1035
        %v1116 = vunpack.c.l.b16 %v1036
        %v1117 = vpack.c.b16 %v1072, %v1069
        %v1118 = vpack.c.b16 %v1073, %v1070
        %v1119 = vpack.c.b16 %v1074, %v1071
        %v1120 = vpack.c.b16 %v1078, %v1075
        %v1121 = vpack.c.b16 %v1079, %v1076
        %v1122 = vpack.c.b16 %v1080, %v1077
        %v1123 = vpack.c.b16 %v1084, %v1081
        %v1124 = vpack.c.b16 %v1085, %v1082
        %v1125 = vpack.c.b16 %v1086, %v1083
        %v1126 = vpack.c.b16 %v1090, %v1087
        %v1127 = vpack.c.b16 %v1091, %v1088
        %v1128 = vpack.c.b16 %v1092, %v1089
        %v1129 = vpack.c.b16 %v1096, %v1093
        %v1130 = vpack.c.b16 %v1097, %v1094
        %v1131 = vpack.c.b16 %v1098, %v1095
        %v1132 = vpack.c.b16 %v1102, %v1099
        %v1133 = vpack.c.b16 %v1103, %v1100
        %v1134 = vpack.c.b16 %v1104, %v1101
        %v1135 = vpack.c.b16 %v1108, %v1105
        %v1136 = vpack.c.b16 %v1109, %v1106
        %v1137 = vpack.c.b16 %v1110, %v1107
        %v1138 = vpack.c.b16 %v1114, %v1111
        %v1139 = vpack.c.b16 %v1115, %v1112
        %v1140 = vpack.c.b16 %v1116, %v1113
        %1165 = vmatpush.bf16.msra.mxu0 %v1138
        %1166 = vmatpush.bf16.msra.mxu0 %v1135
        %1167 = vmatpush.bf16.msra.mxu0 %v1132
        %1168 = vmatpush.bf16.msra.mxu0 %v1129
        %1169 = vmatpush.bf16.msra.mxu0 %v1126
        %1170 = vmatpush.bf16.msra.mxu0 %v1123
        %1171 = vmatpush.bf16.msra.mxu0 %v1120
        %1172 = vmatpush.bf16.msra.mxu0 %v1117
        %1173 = vmatmul.bf16.gmra.mxu0 %v1002
        %v1174 = vpop.f32.mrf.mxu0
        %v1175 = vadd.f32 0.0, %v1174
        %v1176 = vpop.f32.mrf.mxu0
        %v1177 = vadd.f32 0.0, %v1176
        %1178 = vmatmul.bf16.gmra.mxu0 %v1003
        %v1179 = vpop.f32.mrf.mxu0
        %v1180 = vadd.f32 0.0, %v1179
        %v1181 = vpop.f32.mrf.mxu0
        %v1182 = vadd.f32 0.0, %v1181
        %1183 = vmatmul.bf16.gmra.mxu0 %v1004
        %v1184 = vpop.f32.mrf.mxu0
        %v1185 = vadd.f32 0.0, %v1184
        %v1186 = vpop.f32.mrf.mxu0
        %1187 = vdwg.mxu0
        %1188 = vmatpush.bf16.msra.mxu0 %v1139
        %1189 = vmatpush.bf16.msra.mxu0 %v1136
        %1190 = vmatpush.bf16.msra.mxu0 %v1133
        %1191 = vmatpush.bf16.msra.mxu0 %v1130
        %1192 = vmatpush.bf16.msra.mxu0 %v1127
        %1193 = vmatpush.bf16.msra.mxu0 %v1124
        %1194 = vmatpush.bf16.msra.mxu0 %v1121
        %1195 = vmatpush.bf16.msra.mxu0 %v1118
        %1196 = vmatmul.bf16.gmra.mxu0 %v1002
        %v1197 = vpop.f32.mrf.mxu0
        %v1198 = vadd.f32 0.0, %v1197
        %v1199 = vpop.f32.mrf.mxu0
        %v1200 = vadd.f32 0.0, %v1199
        %1201 = vmatmul.bf16.gmra.mxu0 %v1003
        %v1202 = vpop.f32.mrf.mxu0
        %v1203 = vadd.f32 0.0, %v1202
        %v1204 = vpop.f32.mrf.mxu0
        %v1205 = vadd.f32 0.0, %v1204
        %1206 = vmatmul.bf16.gmra.mxu0 %v1004
        %v1207 = vpop.f32.mrf.mxu0
        %v1208 = vadd.f32 0.0, %v1207
        %v1209 = vpop.f32.mrf.mxu0
        %1210 = vdwg.mxu0
        %1211 = vmatpush.bf16.msra.mxu0 %v1140
        %1212 = vmatpush.bf16.msra.mxu0 %v1137
        %1213 = vmatpush.bf16.msra.mxu0 %v1134
        %1214 = vmatpush.bf16.msra.mxu0 %v1131
        %1215 = vmatpush.bf16.msra.mxu0 %v1128
        %1216 = vmatpush.bf16.msra.mxu0 %v1125
        %1217 = vmatpush.bf16.msra.mxu0 %v1122
        %1218 = vmatpush.bf16.msra.mxu0 %v1119
        %1219 = vmatmul.bf16.gmra.mxu0 %v1002
        %v1220 = vpop.f32.mrf.mxu0
        %v1221 = vadd.f32 0.0, %v1220
        %v1222 = vpop.f32.mrf.mxu0
        %v1223 = vadd.f32 0.0, %v1222
        %1224 = vmatmul.bf16.gmra.mxu0 %v1003
        %v1225 = vpop.f32.mrf.mxu0
        %v1226 = vadd.f32 0.0, %v1225
        %v1227 = vpop.f32.mrf.mxu0
        %v1228 = vadd.f32 0.0, %v1227
        %1229 = vmatmul.bf16.gmra.mxu0 %v1004
        %v1230 = vpop.f32.mrf.mxu0
        %v1231 = vadd.f32 0.0, %v1230
        %v1232 = vpop.f32.mrf.mxu0
        %1233 = vdwg.mxu0
        %v1234 = vpack.c.bf16 %v1177, %v1175
        %v1235 = vpack.c.bf16 %v1182, %v1180
        %v1236 = vpack.c.bf16 %v1185, %v1185
        %v1237 = vpack.c.bf16 %v1200, %v1198
        %v1238 = vpack.c.bf16 %v1205, %v1203
        %v1239 = vpack.c.bf16 %v1208, %v1208
        %v1240 = vld [vmem:[%s12] sm:$0xff]
        %v1241 = vld [vmem:[%s12 + $0x8] sm:$0xff]
        %v1242 = vld [vmem:[%s12 + $0x10] sm:$0xff]
        %v1243 = vld [vmem:[%s12 + $0x18] sm:$0xff]
        %v1244 = vld [vmem:[%s12 + $0x20] sm:$0xff]
        %1245 = vmatpush.bf16.xpose.msra.mxu0 0
        %1246 = vmatpush.bf16.xpose.msra.mxu0 0
        %1247 = vmatpush.bf16.xpose.msra.mxu0 0
        %1248 = vmatpush.bf16.xpose.msra.mxu0 0
        %1249 = vmatpush.bf16.xpose.msra.mxu0 0
        %1250 = vmatpush.bf16.xpose.msra.mxu0 %v1239
        %1251 = vmatpush.bf16.xpose.msra.mxu0 %v1238
        %1252 = vmatpush.bf16.xpose.msra.mxu0 %v1237
        %1253 = vmatmul.bf16.gmra.mxu0 %v1234
        %v1254 = vpop.f32.mrf.mxu0
        %v1255 = vadd.f32 %v1240, %v1254
        %v1256 = vpop.f32.mrf.mxu0
        %v1257 = vadd.f32 %v1241, %v1256
        %1258 = vmatmul.bf16.gmra.mxu0 %v1235
        %v1259 = vpop.f32.mrf.mxu0
        %v1260 = vadd.f32 %v1242, %v1259
        %v1261 = vpop.f32.mrf.mxu0
        %v1262 = vadd.f32 %v1243, %v1261
        %1263 = vmatmul.bf16.gmra.mxu0 %v1236
        %v1264 = vpop.f32.mrf.mxu0
        %v1265 = vadd.f32 %v1244, %v1264
        %v1266 = vpop.f32.mrf.mxu0
        %1267 = vdwg.mxu0
        %vm1268 = vcmask 326656
        %v1269 = vsel %vm1268, %v1255, -inf
        %1270 = vmax.xlane.f32.xlu0 %v1269
        %v1271 = vpop.xlane.xlu0 %1270
        %v1272 = vsel %vm1268, %v1257, -inf
        %1273 = vmax.xlane.f32.xlu0 %v1272
        %v1274 = vpop.xlane.xlu0 %1273
        %v1275 = vsel %vm1268, %v1260, -inf
        %1276 = vmax.xlane.f32.xlu0 %v1275
        %v1277 = vpop.xlane.xlu0 %1276
        %v1278 = vsel %vm1268, %v1262, -inf
        %1279 = vmax.xlane.f32.xlu0 %v1278
        %v1280 = vpop.xlane.xlu0 %1279
        %v1281 = vsel %vm1268, %v1265, -inf
        %1282 = vmax.xlane.f32.xlu0 %v1281
        %v1283 = vpop.xlane.xlu0 %1282
        %v1284 = vsub.f32 %v1255, %v1271
        %v1285 = vsub.f32 %v1257, %v1274
        %v1286 = vsub.f32 %v1260, %v1277
        %v1287 = vsub.f32 %v1262, %v1280
        %v1288 = vsub.f32 %v1265, %v1283
        %v1289 = vmul.f32 %v1284, 1.442695
        %v1290 = vpow.pop %v1289
        %v1291 = vmul.f32 %v1285, 1.442695
        %v1292 = vpow.pop %v1291
        %v1293 = vmul.f32 %v1286, 1.442695
        %v1294 = vpow.pop %v1293
        %v1295 = vmul.f32 %v1287, 1.442695
        %v1296 = vpow.pop %v1295
        %v1297 = vmul.f32 %v1288, 1.442695
        %v1298 = vpow.pop %v1297
        %v1299 = vsel %vm1268, %v1290, 0.0
        %1300 = vadd.xlane.f32.xlu0 %v1299
        %v1301 = vpop.xlane.xlu0 %1300
        %v1302 = vsel %vm1268, %v1292, 0.0
        %1303 = vadd.xlane.f32.xlu0 %v1302
        %v1304 = vpop.xlane.xlu0 %1303
        %v1305 = vsel %vm1268, %v1294, 0.0
        %1306 = vadd.xlane.f32.xlu0 %v1305
        %v1307 = vpop.xlane.xlu0 %1306
        %v1308 = vsel %vm1268, %v1296, 0.0
        %1309 = vadd.xlane.f32.xlu0 %v1308
        %v1310 = vpop.xlane.xlu0 %1309
        %v1311 = vsel %vm1268, %v1298, 0.0
        %1312 = vadd.xlane.f32.xlu0 %v1311
        %v1313 = vpop.xlane.xlu0 %1312
        %v1314 = vrcp.pop %v1301
        %v1315 = vrcp.pop %v1304
        %v1316 = vrcp.pop %v1307
        %v1317 = vrcp.pop %v1310
        %v1318 = vrcp.pop %v1313
        %v1319 = vmul.f32 %v1290, %v1314
        %v1320 = vmul.f32 %v1292, %v1315
        %v1321 = vmul.f32 %v1294, %v1316
        %v1322 = vmul.f32 %v1296, %v1317
        %v1323 = vmul.f32 %v1298, %v1318
        %v1324 = vpack.c.bf16 %v1320, %v1319
        %v1325 = vpack.c.bf16 %v1322, %v1321
        %v1326 = vpack.c.bf16 %v1323, %v1323
        %v1327 = vpack.c.bf16 %v1223, %v1221
        %v1328 = vpack.c.bf16 %v1228, %v1226
        %v1329 = vpack.c.bf16 %v1231, %v1231
        %v1331 = vsel %vm1268, %v1324, 0
        %v1334 = vsel %vm1268, %v1325, 0
        %v1337 = vsel %vm1268, %v1326, 0
        %vm1339 = vcmask 1043456
        %v1341 = vsel %vm1339, %v1329, 0
        %1343 = vmatpush.bf16.msra.mxu0 0
        %1344 = vmatpush.bf16.msra.mxu0 0
        %1345 = vmatpush.bf16.msra.mxu0 0
        %1346 = vmatpush.bf16.msra.mxu0 0
        %1347 = vmatpush.bf16.msra.mxu0 0
        %1348 = vmatpush.bf16.msra.mxu0 %v1341
        %1349 = vmatpush.bf16.msra.mxu0 %v1328
        %1350 = vmatpush.bf16.msra.mxu0 %v1327
        %1351 = vmatmul.bf16.gmra.mxu0 %v1331
        %v1352 = vpop.f32.mrf.mxu0
        %v1353 = vadd.f32 0.0, %v1352
        %v1354 = vpop.f32.mrf.mxu0
        %v1355 = vadd.f32 0.0, %v1354
        %1356 = vmatmul.bf16.gmra.mxu0 %v1334
        %v1357 = vpop.f32.mrf.mxu0
        %v1358 = vadd.f32 0.0, %v1357
        %v1359 = vpop.f32.mrf.mxu0
        %v1360 = vadd.f32 0.0, %v1359
        %1361 = vmatmul.bf16.gmra.mxu0 %v1337
        %v1362 = vpop.f32.mrf.mxu0
        %v1363 = vadd.f32 0.0, %v1362
        %v1364 = vpop.f32.mrf.mxu0
        %1365 = vdwg.mxu0
        %v1366 = vpack.c.bf16 %v1355, %v1353
        %v1367 = vpack.c.bf16 %v1360, %v1358
        %v1368 = vpack.c.bf16 %v1363, %v1363
        %v1369 = vld [vmem:[%s6] sm:$0xf]
        %v1370 = vld [vmem:[%s6 + $0x4] sm:$0xf]
        %v1371 = vld [vmem:[%s6 + $0x8] sm:$0xf]
        %v1372 = vld [vmem:[%s6 + $0xc] sm:$0xf]
        %v1373 = vld [vmem:[%s6 + $0x10] sm:$0xf]
        %v1374 = vld [vmem:[%s6 + $0x14] sm:$0xf]
        %v1375 = vld [vmem:[%s6 + $0x18] sm:$0xf]
        %v1376 = vld [vmem:[%s6 + $0x1c] sm:$0xf]
        %v1377 = vld [vmem:[%s6 + $0x20] sm:$0xf]
        %v1378 = vld [vmem:[%s6 + $0x24] sm:$0xf]
        %v1379 = vld [vmem:[%s6 + $0x28] sm:$0xf]
        %v1380 = vld [vmem:[%s6 + $0x2c] sm:$0xf]
        %v1381 = vld [vmem:[%s6 + $0x30] sm:$0xf]
        %v1382 = vld [vmem:[%s6 + $0x34] sm:$0xf]
        %v1383 = vld [vmem:[%s6 + $0x38] sm:$0xf]
        %v1384 = vld [vmem:[%s6 + $0x3c] sm:$0xf]
        %v1401 = vunpack.c.l.b16 %v1369
        %v1402 = vunpack.c.l.b16 %v1370
        %v1403 = vunpack.c.l.b16 %v1371
        %v1404 = vunpack.c.l.b16 %v1372
        %v1405 = vunpack.c.l.b16 %v1373
        %v1406 = vunpack.c.l.b16 %v1374
        %v1407 = vunpack.c.l.b16 %v1375
        %v1408 = vunpack.c.l.b16 %v1376
        %v1409 = vunpack.c.l.b16 %v1377
        %v1410 = vunpack.c.l.b16 %v1378
        %v1411 = vunpack.c.l.b16 %v1379
        %v1412 = vunpack.c.l.b16 %v1380
        %v1413 = vunpack.c.l.b16 %v1381
        %v1414 = vunpack.c.l.b16 %v1382
        %v1415 = vunpack.c.l.b16 %v1383
        %v1416 = vunpack.c.l.b16 %v1384
        %v1417 = vpack.c.b16 %v1402, %v1401
        %v1418 = vpack.c.b16 %v1404, %v1403
        %v1419 = vpack.c.b16 %v1406, %v1405
        %v1420 = vpack.c.b16 %v1408, %v1407
        %v1421 = vpack.c.b16 %v1410, %v1409
        %v1422 = vpack.c.b16 %v1412, %v1411
        %v1423 = vpack.c.b16 %v1414, %v1413
        %v1424 = vpack.c.b16 %v1416, %v1415
        %1433 = vmatpush.bf16.msra.mxu0 %v1424
        %1434 = vmatpush.bf16.msra.mxu0 %v1423
        %1435 = vmatpush.bf16.msra.mxu0 %v1422
        %1436 = vmatpush.bf16.msra.mxu0 %v1421
        %1437 = vmatpush.bf16.msra.mxu0 %v1420
        %1438 = vmatpush.bf16.msra.mxu0 %v1419
        %1439 = vmatpush.bf16.msra.mxu0 %v1418
        %1440 = vmatpush.bf16.msra.mxu0 %v1417
        %1441 = vmatmul.bf16.gmra.mxu0 %v1366
        %v1442 = vpop.f32.mrf.mxu0
        %v1443 = vadd.f32 0.0, %v1442
        %v1444 = vpop.f32.mrf.mxu0
        %v1445 = vadd.f32 0.0, %v1444
        %1446 = vmatmul.bf16.gmra.mxu0 %v1367
        %v1447 = vpop.f32.mrf.mxu0
        %v1448 = vadd.f32 0.0, %v1447
        %v1449 = vpop.f32.mrf.mxu0
        %v1450 = vadd.f32 0.0, %v1449
        %1451 = vmatmul.bf16.gmra.mxu0 %v1368
        %v1452 = vpop.f32.mrf.mxu0
        %v1453 = vadd.f32 0.0, %v1452
        %v1454 = vpop.f32.mrf.mxu0
        %1455 = vdwg.mxu0
        %v1456 = vadd.f32 %v812, %v1443
        %v1457 = vadd.f32 %v814, %v1445
        %v1458 = vadd.f32 %v817, %v1448
        %v1459 = vadd.f32 %v819, %v1450
        %v1460 = vadd.f32 %v908, %v1453
        %v1461 = vmul.f32 %v1456, %v1456
        %v1462 = vmul.f32 %v1457, %v1457
        %v1463 = vmul.f32 %v1458, %v1458
        %v1464 = vmul.f32 %v1459, %v1459
        %v1465 = vmul.f32 %v1460, %v1460
        %1466 = vadd.xlane.f32.xlu0 %v1461
        %v1467 = vpop.xlane.xlu0 %1466
        %1468 = vadd.xlane.f32.xlu0 %v1462
        %v1469 = vpop.xlane.xlu0 %1468
        %1470 = vadd.xlane.f32.xlu0 %v1463
        %v1471 = vpop.xlane.xlu0 %1470
        %1472 = vadd.xlane.f32.xlu0 %v1464
        %v1473 = vpop.xlane.xlu0 %1472
        %1474 = vadd.xlane.f32.xlu0 %v1465
        %v1475 = vpop.xlane.xlu0 %1474
        %v1476 = vmul.f32 %v1467, %v936
        %v1477 = vmul.f32 %v1469, %v936
        %v1478 = vmul.f32 %v1471, %v936
        %v1479 = vmul.f32 %v1473, %v936
        %v1480 = vmul.f32 %v1475, %v936
        %v1481 = vadd.f32 %v1476, 1e-06
        %v1482 = vadd.f32 %v1477, 1e-06
        %v1483 = vadd.f32 %v1478, 1e-06
        %v1484 = vadd.f32 %v1479, 1e-06
        %v1485 = vadd.f32 %v1480, 1e-06
        %v1486 = vrsqrt.pop %v1481
        %v1487 = vmul.f32 %v1486, %v1481
        %v1488 = vmul.f32 %v1487, %v1486
        %v1489 = vmul.f32 0.5, %v1488
        %v1490 = vsub.f32 1.5, %v1489
        %v1491 = vmul.f32 %v1486, %v1490
        %vm1492 = vweird.f32 %v1481
        %vm1493 = vweird.f32 %v1486
        %vm1494 = vmor %vm1492, %vm1493
        %v1495 = vsel %vm1494, %v1486, %v1491
        %v1496 = vrsqrt.pop %v1482
        %v1497 = vmul.f32 %v1496, %v1482
        %v1498 = vmul.f32 %v1497, %v1496
        %v1499 = vmul.f32 0.5, %v1498
        %v1500 = vsub.f32 1.5, %v1499
        %v1501 = vmul.f32 %v1496, %v1500
        %vm1502 = vweird.f32 %v1482
        %vm1503 = vweird.f32 %v1496
        %vm1504 = vmor %vm1502, %vm1503
        %v1505 = vsel %vm1504, %v1496, %v1501
        %v1506 = vrsqrt.pop %v1483
        %v1507 = vmul.f32 %v1506, %v1483
        %v1508 = vmul.f32 %v1507, %v1506
        %v1509 = vmul.f32 0.5, %v1508
        %v1510 = vsub.f32 1.5, %v1509
        %v1511 = vmul.f32 %v1506, %v1510
        %vm1512 = vweird.f32 %v1483
        %vm1513 = vweird.f32 %v1506
        %vm1514 = vmor %vm1512, %vm1513
        %v1515 = vsel %vm1514, %v1506, %v1511
        %v1516 = vrsqrt.pop %v1484
        %v1517 = vmul.f32 %v1516, %v1484
        %v1518 = vmul.f32 %v1517, %v1516
        %v1519 = vmul.f32 0.5, %v1518
        %v1520 = vsub.f32 1.5, %v1519
        %v1521 = vmul.f32 %v1516, %v1520
        %vm1522 = vweird.f32 %v1484
        %vm1523 = vweird.f32 %v1516
        %vm1524 = vmor %vm1522, %vm1523
        %v1525 = vsel %vm1524, %v1516, %v1521
        %v1526 = vrsqrt.pop %v1485
        %v1527 = vmul.f32 %v1526, %v1485
        %v1528 = vmul.f32 %v1527, %v1526
        %v1529 = vmul.f32 0.5, %v1528
        %v1530 = vsub.f32 1.5, %v1529
        %v1531 = vmul.f32 %v1526, %v1530
        %vm1532 = vweird.f32 %v1485
        %vm1533 = vweird.f32 %v1526
        %vm1534 = vmor %vm1532, %vm1533
        %v1535 = vsel %vm1534, %v1526, %v1531
        %v1536 = vmul.f32 %v1456, %v1495
        %v1537 = vmul.f32 %v1457, %v1505
        %v1538 = vmul.f32 %v1458, %v1515
        %v1539 = vmul.f32 %v1459, %v1525
        %v1540 = vmul.f32 %v1460, %v1535
        %v1541 = vpack.c.bf16 %v1537, %v1536
        %v1542 = vpack.c.bf16 %v1539, %v1538
        %v1543 = vpack.c.bf16 %v1540, %v1540
        %v1544 = vld [vmem:[%s7] sm:$0xff]
        %v1545 = vld [vmem:[%s7 + $0x8] sm:$0xff]
        %v1546 = vld [vmem:[%s7 + $0x10] sm:$0xff]
        %v1547 = vld [vmem:[%s7 + $0x18] sm:$0xff]
        %v1548 = vld [vmem:[%s7 + $0x20] sm:$0xff]
        %v1549 = vld [vmem:[%s7 + $0x28] sm:$0xff]
        %v1550 = vld [vmem:[%s7 + $0x30] sm:$0xff]
        %v1551 = vld [vmem:[%s7 + $0x38] sm:$0xff]
        %v1552 = vld [vmem:[%s7 + $0x40] sm:$0xff]
        %v1553 = vld [vmem:[%s7 + $0x48] sm:$0xff]
        %v1554 = vld [vmem:[%s7 + $0x50] sm:$0xff]
        %v1555 = vld [vmem:[%s7 + $0x58] sm:$0xff]
        %v1556 = vld [vmem:[%s7 + $0x60] sm:$0xff]
        %v1557 = vld [vmem:[%s7 + $0x68] sm:$0xff]
        %v1558 = vld [vmem:[%s7 + $0x70] sm:$0xff]
        %v1559 = vld [vmem:[%s7 + $0x78] sm:$0xff]
        %v1560 = vld [vmem:[%s8] sm:$0x3]
        %v1562 = vperm.slane %v1560, 0
        %v1563 = vperm.slane %v1560, 1
        %v1582 = vunpack.c.l.b16 %v1544
        %v1583 = vunpack.c.h.b16 %v1544
        %v1584 = vunpack.c.l.b16 %v1545
        %v1585 = vunpack.c.h.b16 %v1545
        %v1586 = vunpack.c.l.b16 %v1546
        %v1587 = vunpack.c.h.b16 %v1546
        %v1588 = vunpack.c.l.b16 %v1547
        %v1589 = vunpack.c.h.b16 %v1547
        %v1590 = vunpack.c.l.b16 %v1548
        %v1591 = vunpack.c.h.b16 %v1548
        %v1592 = vunpack.c.l.b16 %v1549
        %v1593 = vunpack.c.h.b16 %v1549
        %v1594 = vunpack.c.l.b16 %v1550
        %v1595 = vunpack.c.h.b16 %v1550
        %v1596 = vunpack.c.l.b16 %v1551
        %v1597 = vunpack.c.h.b16 %v1551
        %v1598 = vunpack.c.l.b16 %v1552
        %v1599 = vunpack.c.h.b16 %v1552
        %v1600 = vunpack.c.l.b16 %v1553
        %v1601 = vunpack.c.h.b16 %v1553
        %v1602 = vunpack.c.l.b16 %v1554
        %v1603 = vunpack.c.h.b16 %v1554
        %v1604 = vunpack.c.l.b16 %v1555
        %v1605 = vunpack.c.h.b16 %v1555
        %v1606 = vunpack.c.l.b16 %v1556
        %v1607 = vunpack.c.h.b16 %v1556
        %v1608 = vunpack.c.l.b16 %v1557
        %v1609 = vunpack.c.h.b16 %v1557
        %v1610 = vunpack.c.l.b16 %v1558
        %v1611 = vunpack.c.h.b16 %v1558
        %v1612 = vunpack.c.l.b16 %v1559
        %v1613 = vunpack.c.h.b16 %v1559
        %v1614 = vpack.c.b16 %v1584, %v1582
        %v1615 = vpack.c.b16 %v1585, %v1583
        %v1616 = vpack.c.b16 %v1588, %v1586
        %v1617 = vpack.c.b16 %v1589, %v1587
        %v1618 = vpack.c.b16 %v1592, %v1590
        %v1619 = vpack.c.b16 %v1593, %v1591
        %v1620 = vpack.c.b16 %v1596, %v1594
        %v1621 = vpack.c.b16 %v1597, %v1595
        %v1622 = vpack.c.b16 %v1600, %v1598
        %v1623 = vpack.c.b16 %v1601, %v1599
        %v1624 = vpack.c.b16 %v1604, %v1602
        %v1625 = vpack.c.b16 %v1605, %v1603
        %v1626 = vpack.c.b16 %v1608, %v1606
        %v1627 = vpack.c.b16 %v1609, %v1607
        %v1628 = vpack.c.b16 %v1612, %v1610
        %v1629 = vpack.c.b16 %v1613, %v1611
        %1646 = vmatpush.bf16.msra.mxu0 %v1628
        %1647 = vmatpush.bf16.msra.mxu0 %v1626
        %1648 = vmatpush.bf16.msra.mxu0 %v1624
        %1649 = vmatpush.bf16.msra.mxu0 %v1622
        %1650 = vmatpush.bf16.msra.mxu0 %v1620
        %1651 = vmatpush.bf16.msra.mxu0 %v1618
        %1652 = vmatpush.bf16.msra.mxu0 %v1616
        %1653 = vmatpush.bf16.msra.mxu0 %v1614
        %1654 = vmatmul.bf16.gmra.mxu0 %v1541
        %v1655 = vpop.f32.mrf.mxu0
        %v1656 = vadd.f32 %v1562, %v1655
        %v1657 = vpop.f32.mrf.mxu0
        %v1658 = vadd.f32 %v1562, %v1657
        %1659 = vmatmul.bf16.gmra.mxu0 %v1542
        %v1660 = vpop.f32.mrf.mxu0
        %v1661 = vadd.f32 %v1562, %v1660
        %v1662 = vpop.f32.mrf.mxu0
        %v1663 = vadd.f32 %v1562, %v1662
        %1664 = vmatmul.bf16.gmra.mxu0 %v1543
        %v1665 = vpop.f32.mrf.mxu0
        %v1666 = vadd.f32 %v1562, %v1665
        %v1667 = vpop.f32.mrf.mxu0
        %1668 = vdwg.mxu0
        %1669 = vmatpush.bf16.msra.mxu0 %v1629
        %1670 = vmatpush.bf16.msra.mxu0 %v1627
        %1671 = vmatpush.bf16.msra.mxu0 %v1625
        %1672 = vmatpush.bf16.msra.mxu0 %v1623
        %1673 = vmatpush.bf16.msra.mxu0 %v1621
        %1674 = vmatpush.bf16.msra.mxu0 %v1619
        %1675 = vmatpush.bf16.msra.mxu0 %v1617
        %1676 = vmatpush.bf16.msra.mxu0 %v1615
        %1677 = vmatmul.bf16.gmra.mxu0 %v1541
        %v1678 = vpop.f32.mrf.mxu0
        %v1679 = vadd.f32 %v1563, %v1678
        %v1680 = vpop.f32.mrf.mxu0
        %v1681 = vadd.f32 %v1563, %v1680
        %1682 = vmatmul.bf16.gmra.mxu0 %v1542
        %v1683 = vpop.f32.mrf.mxu0
        %v1684 = vadd.f32 %v1563, %v1683
        %v1685 = vpop.f32.mrf.mxu0
        %v1686 = vadd.f32 %v1563, %v1685
        %1687 = vmatmul.bf16.gmra.mxu0 %v1543
        %v1688 = vpop.f32.mrf.mxu0
        %v1689 = vadd.f32 %v1563, %v1688
        %v1690 = vpop.f32.mrf.mxu0
        %1691 = vdwg.mxu0
        %v1692 = vmul.f32 %v1656, %v1656
        %v1693 = vmul.f32 %v1679, %v1679
        %v1694 = vmul.f32 %v1658, %v1658
        %v1695 = vmul.f32 %v1681, %v1681
        %v1696 = vmul.f32 %v1661, %v1661
        %v1697 = vmul.f32 %v1684, %v1684
        %v1698 = vmul.f32 %v1663, %v1663
        %v1699 = vmul.f32 %v1686, %v1686
        %v1700 = vmul.f32 %v1666, %v1666
        %v1701 = vmul.f32 %v1689, %v1689
        %v1702 = vmul.f32 %v1656, %v1692
        %v1703 = vmul.f32 %v1679, %v1693
        %v1704 = vmul.f32 %v1658, %v1694
        %v1705 = vmul.f32 %v1681, %v1695
        %v1706 = vmul.f32 %v1661, %v1696
        %v1707 = vmul.f32 %v1684, %v1697
        %v1708 = vmul.f32 %v1663, %v1698
        %v1709 = vmul.f32 %v1686, %v1699
        %v1710 = vmul.f32 %v1666, %v1700
        %v1711 = vmul.f32 %v1689, %v1701
        %v1712 = vmul.f32 %v1702, 0.044715
        %v1713 = vmul.f32 %v1703, 0.044715
        %v1714 = vmul.f32 %v1704, 0.044715
        %v1715 = vmul.f32 %v1705, 0.044715
        %v1716 = vmul.f32 %v1706, 0.044715
        %v1717 = vmul.f32 %v1707, 0.044715
        %v1718 = vmul.f32 %v1708, 0.044715
        %v1719 = vmul.f32 %v1709, 0.044715
        %v1720 = vmul.f32 %v1710, 0.044715
        %v1721 = vmul.f32 %v1711, 0.044715
        %v1722 = vadd.f32 %v1656, %v1712
        %v1723 = vadd.f32 %v1679, %v1713
        %v1724 = vadd.f32 %v1658, %v1714
        %v1725 = vadd.f32 %v1681, %v1715
        %v1726 = vadd.f32 %v1661, %v1716
        %v1727 = vadd.f32 %v1684, %v1717
        %v1728 = vadd.f32 %v1663, %v1718
        %v1729 = vadd.f32 %v1686, %v1719
        %v1730 = vadd.f32 %v1666, %v1720
        %v1731 = vadd.f32 %v1689, %v1721
        %v1732 = vmul.f32 %v1722, 0.7978846
        %v1733 = vmul.f32 %v1723, 0.7978846
        %v1734 = vmul.f32 %v1724, 0.7978846
        %v1735 = vmul.f32 %v1725, 0.7978846
        %v1736 = vmul.f32 %v1726, 0.7978846
        %v1737 = vmul.f32 %v1727, 0.7978846
        %v1738 = vmul.f32 %v1728, 0.7978846
        %v1739 = vmul.f32 %v1729, 0.7978846
        %v1740 = vmul.f32 %v1730, 0.7978846
        %v1741 = vmul.f32 %v1731, 0.7978846
        %v1742 = vtanh.pop %v1732
        %v1743 = vtanh.pop %v1733
        %v1744 = vtanh.pop %v1734
        %v1745 = vtanh.pop %v1735
        %v1746 = vtanh.pop %v1736
        %v1747 = vtanh.pop %v1737
        %v1748 = vtanh.pop %v1738
        %v1749 = vtanh.pop %v1739
        %v1750 = vtanh.pop %v1740
        %v1751 = vtanh.pop %v1741
        %v1752 = vadd.f32 %v1742, 1.0
        %v1753 = vadd.f32 %v1743, 1.0
        %v1754 = vadd.f32 %v1744, 1.0
        %v1755 = vadd.f32 %v1745, 1.0
        %v1756 = vadd.f32 %v1746, 1.0
        %v1757 = vadd.f32 %v1747, 1.0
        %v1758 = vadd.f32 %v1748, 1.0
        %v1759 = vadd.f32 %v1749, 1.0
        %v1760 = vadd.f32 %v1750, 1.0
        %v1761 = vadd.f32 %v1751, 1.0
        %v1762 = vmul.f32 %v1752, 0.5
        %v1763 = vmul.f32 %v1753, 0.5
        %v1764 = vmul.f32 %v1754, 0.5
        %v1765 = vmul.f32 %v1755, 0.5
        %v1766 = vmul.f32 %v1756, 0.5
        %v1767 = vmul.f32 %v1757, 0.5
        %v1768 = vmul.f32 %v1758, 0.5
        %v1769 = vmul.f32 %v1759, 0.5
        %v1770 = vmul.f32 %v1760, 0.5
        %v1771 = vmul.f32 %v1761, 0.5
        %v1772 = vmul.f32 %v1656, %v1762
        %v1773 = vmul.f32 %v1679, %v1763
        %v1774 = vmul.f32 %v1658, %v1764
        %v1775 = vmul.f32 %v1681, %v1765
        %v1776 = vmul.f32 %v1661, %v1766
        %v1777 = vmul.f32 %v1684, %v1767
        %v1778 = vmul.f32 %v1663, %v1768
        %v1779 = vmul.f32 %v1686, %v1769
        %v1780 = vmul.f32 %v1666, %v1770
        %v1781 = vmul.f32 %v1689, %v1771
        %v1782 = vpack.c.bf16 %v1774, %v1772
        %v1783 = vpack.c.bf16 %v1775, %v1773
        %v1784 = vpack.c.bf16 %v1778, %v1776
        %v1785 = vpack.c.bf16 %v1779, %v1777
        %v1786 = vpack.c.bf16 %v1780, %v1780
        %v1787 = vpack.c.bf16 %v1781, %v1781
        %v1788 = vld [vmem:[%s9] sm:$0xf]
        %v1789 = vld [vmem:[%s9 + $0x4] sm:$0xf]
        %v1790 = vld [vmem:[%s9 + $0x8] sm:$0xf]
        %v1791 = vld [vmem:[%s9 + $0xc] sm:$0xf]
        %v1792 = vld [vmem:[%s9 + $0x10] sm:$0xf]
        %v1793 = vld [vmem:[%s9 + $0x14] sm:$0xf]
        %v1794 = vld [vmem:[%s9 + $0x18] sm:$0xf]
        %v1795 = vld [vmem:[%s9 + $0x1c] sm:$0xf]
        %v1796 = vld [vmem:[%s9 + $0x20] sm:$0xf]
        %v1797 = vld [vmem:[%s9 + $0x24] sm:$0xf]
        %v1798 = vld [vmem:[%s9 + $0x28] sm:$0xf]
        %v1799 = vld [vmem:[%s9 + $0x2c] sm:$0xf]
        %v1800 = vld [vmem:[%s9 + $0x30] sm:$0xf]
        %v1801 = vld [vmem:[%s9 + $0x34] sm:$0xf]
        %v1802 = vld [vmem:[%s9 + $0x38] sm:$0xf]
        %v1803 = vld [vmem:[%s9 + $0x3c] sm:$0xf]
        %v1804 = vld [vmem:[%s9 + $0x40] sm:$0xf]
        %v1805 = vld [vmem:[%s9 + $0x44] sm:$0xf]
        %v1806 = vld [vmem:[%s9 + $0x48] sm:$0xf]
        %v1807 = vld [vmem:[%s9 + $0x4c] sm:$0xf]
        %v1808 = vld [vmem:[%s9 + $0x50] sm:$0xf]
        %v1809 = vld [vmem:[%s9 + $0x54] sm:$0xf]
        %v1810 = vld [vmem:[%s9 + $0x58] sm:$0xf]
        %v1811 = vld [vmem:[%s9 + $0x5c] sm:$0xf]
        %v1812 = vld [vmem:[%s9 + $0x60] sm:$0xf]
        %v1813 = vld [vmem:[%s9 + $0x64] sm:$0xf]
        %v1814 = vld [vmem:[%s9 + $0x68] sm:$0xf]
        %v1815 = vld [vmem:[%s9 + $0x6c] sm:$0xf]
        %v1816 = vld [vmem:[%s9 + $0x70] sm:$0xf]
        %v1817 = vld [vmem:[%s9 + $0x74] sm:$0xf]
        %v1818 = vld [vmem:[%s9 + $0x78] sm:$0xf]
        %v1819 = vld [vmem:[%s9 + $0x7c] sm:$0xf]
        %v1820 = vld [vmem:[%s10] sm:$0x1]
        %v1822 = vperm.slane %v1820, 0
        %v1856 = vunpack.c.l.b16 %v1788
        %v1857 = vunpack.c.l.b16 %v1789
        %v1858 = vunpack.c.l.b16 %v1790
        %v1859 = vunpack.c.l.b16 %v1791
        %v1860 = vunpack.c.l.b16 %v1792
        %v1861 = vunpack.c.l.b16 %v1793
        %v1862 = vunpack.c.l.b16 %v1794
        %v1863 = vunpack.c.l.b16 %v1795
        %v1864 = vunpack.c.l.b16 %v1796
        %v1865 = vunpack.c.l.b16 %v1797
        %v1866 = vunpack.c.l.b16 %v1798
        %v1867 = vunpack.c.l.b16 %v1799
        %v1868 = vunpack.c.l.b16 %v1800
        %v1869 = vunpack.c.l.b16 %v1801
        %v1870 = vunpack.c.l.b16 %v1802
        %v1871 = vunpack.c.l.b16 %v1803
        %v1872 = vunpack.c.l.b16 %v1804
        %v1873 = vunpack.c.l.b16 %v1805
        %v1874 = vunpack.c.l.b16 %v1806
        %v1875 = vunpack.c.l.b16 %v1807
        %v1876 = vunpack.c.l.b16 %v1808
        %v1877 = vunpack.c.l.b16 %v1809
        %v1878 = vunpack.c.l.b16 %v1810
        %v1879 = vunpack.c.l.b16 %v1811
        %v1880 = vunpack.c.l.b16 %v1812
        %v1881 = vunpack.c.l.b16 %v1813
        %v1882 = vunpack.c.l.b16 %v1814
        %v1883 = vunpack.c.l.b16 %v1815
        %v1884 = vunpack.c.l.b16 %v1816
        %v1885 = vunpack.c.l.b16 %v1817
        %v1886 = vunpack.c.l.b16 %v1818
        %v1887 = vunpack.c.l.b16 %v1819
        %v1888 = vpack.c.b16 %v1857, %v1856
        %v1889 = vpack.c.b16 %v1859, %v1858
        %v1890 = vpack.c.b16 %v1861, %v1860
        %v1891 = vpack.c.b16 %v1863, %v1862
        %v1892 = vpack.c.b16 %v1865, %v1864
        %v1893 = vpack.c.b16 %v1867, %v1866
        %v1894 = vpack.c.b16 %v1869, %v1868
        %v1895 = vpack.c.b16 %v1871, %v1870
        %v1896 = vpack.c.b16 %v1873, %v1872
        %v1897 = vpack.c.b16 %v1875, %v1874
        %v1898 = vpack.c.b16 %v1877, %v1876
        %v1899 = vpack.c.b16 %v1879, %v1878
        %v1900 = vpack.c.b16 %v1881, %v1880
        %v1901 = vpack.c.b16 %v1883, %v1882
        %v1902 = vpack.c.b16 %v1885, %v1884
        %v1903 = vpack.c.b16 %v1887, %v1886
        %1920 = vmatpush.bf16.msra.mxu0 %v1895
        %1921 = vmatpush.bf16.msra.mxu0 %v1894
        %1922 = vmatpush.bf16.msra.mxu0 %v1893
        %1923 = vmatpush.bf16.msra.mxu0 %v1892
        %1924 = vmatpush.bf16.msra.mxu0 %v1891
        %1925 = vmatpush.bf16.msra.mxu0 %v1890
        %1926 = vmatpush.bf16.msra.mxu0 %v1889
        %1927 = vmatpush.bf16.msra.mxu0 %v1888
        %1928 = vmatmul.bf16.gmra.mxu0 %v1782
        %v1929 = vpop.f32.mrf.mxu0
        %v1930 = vadd.f32 %v1822, %v1929
        %v1931 = vpop.f32.mrf.mxu0
        %v1932 = vadd.f32 %v1822, %v1931
        %1933 = vmatmul.bf16.gmra.mxu0 %v1784
        %v1934 = vpop.f32.mrf.mxu0
        %v1935 = vadd.f32 %v1822, %v1934
        %v1936 = vpop.f32.mrf.mxu0
        %v1937 = vadd.f32 %v1822, %v1936
        %1938 = vmatmul.bf16.gmra.mxu0 %v1786
        %v1939 = vpop.f32.mrf.mxu0
        %v1940 = vadd.f32 %v1822, %v1939
        %v1941 = vpop.f32.mrf.mxu0
        %1942 = vdwg.mxu0
        %1943 = vmatpush.bf16.msra.mxu0 %v1903
        %1944 = vmatpush.bf16.msra.mxu0 %v1902
        %1945 = vmatpush.bf16.msra.mxu0 %v1901
        %1946 = vmatpush.bf16.msra.mxu0 %v1900
        %1947 = vmatpush.bf16.msra.mxu0 %v1899
        %1948 = vmatpush.bf16.msra.mxu0 %v1898
        %1949 = vmatpush.bf16.msra.mxu0 %v1897
        %1950 = vmatpush.bf16.msra.mxu0 %v1896
        %1951 = vmatmul.bf16.gmra.mxu0 %v1783
        %v1952 = vpop.f32.mrf.mxu0
        %v1953 = vadd.f32 %v1930, %v1952
        %v1954 = vpop.f32.mrf.mxu0
        %v1955 = vadd.f32 %v1932, %v1954
        %1956 = vmatmul.bf16.gmra.mxu0 %v1785
        %v1957 = vpop.f32.mrf.mxu0
        %v1958 = vadd.f32 %v1935, %v1957
        %v1959 = vpop.f32.mrf.mxu0
        %v1960 = vadd.f32 %v1937, %v1959
        %1961 = vmatmul.bf16.gmra.mxu0 %v1787
        %v1962 = vpop.f32.mrf.mxu0
        %v1963 = vadd.f32 %v1940, %v1962
        %v1964 = vpop.f32.mrf.mxu0
        %1965 = vdwg.mxu0
        %v1966 = vadd.f32 %v1456, %v1953
        %v1967 = vadd.f32 %v1457, %v1955
        %v1968 = vadd.f32 %v1458, %v1958
        %v1969 = vadd.f32 %v1459, %v1960
        %v1970 = vadd.f32 %v1460, %v1963
        %1971 = vst [vmem:[%s548] sm:$0xff] %v1966
        %1972 = vst [vmem:[%s548 + $0x8] sm:$0xff] %v1967
        %1973 = vst [vmem:[%s548 + $0x10] sm:$0xff] %v1968
        %1974 = vst [vmem:[%s548 + $0x18] sm:$0xff] %v1969
        %1975 = vst [vmem:[%s548 + $0x20] sm:$0xff] %v1970
        %v1976 = vmul.f32 %v1966, %v1966
        %v1977 = vmul.f32 %v1967, %v1967
        %v1978 = vmul.f32 %v1968, %v1968
        %v1979 = vmul.f32 %v1969, %v1969
        %v1980 = vmul.f32 %v1970, %v1970
        %1981 = vadd.xlane.f32.xlu0 %v1976
        %v1982 = vpop.xlane.xlu0 %1981
        %1983 = vadd.xlane.f32.xlu0 %v1977
        %v1984 = vpop.xlane.xlu0 %1983
        %1985 = vadd.xlane.f32.xlu0 %v1978
        %v1986 = vpop.xlane.xlu0 %1985
        %1987 = vadd.xlane.f32.xlu0 %v1979
        %v1988 = vpop.xlane.xlu0 %1987
        %1989 = vadd.xlane.f32.xlu0 %v1980
        %v1990 = vpop.xlane.xlu0 %1989
        %v1991 = vmul.f32 %v1982, %v936
        %v1992 = vmul.f32 %v1984, %v936
        %v1993 = vmul.f32 %v1986, %v936
        %v1994 = vmul.f32 %v1988, %v936
        %v1995 = vmul.f32 %v1990, %v936
        %v1996 = vadd.f32 %v1991, 1e-06
        %v1997 = vadd.f32 %v1992, 1e-06
        %v1998 = vadd.f32 %v1993, 1e-06
        %v1999 = vadd.f32 %v1994, 1e-06
        %v2000 = vadd.f32 %v1995, 1e-06
        %v2001 = vrsqrt.pop %v1996
        %v2002 = vmul.f32 %v2001, %v1996
        %v2003 = vmul.f32 %v2002, %v2001
        %v2004 = vmul.f32 0.5, %v2003
        %v2005 = vsub.f32 1.5, %v2004
        %v2006 = vmul.f32 %v2001, %v2005
        %vm2007 = vweird.f32 %v1996
        %vm2008 = vweird.f32 %v2001
        %vm2009 = vmor %vm2007, %vm2008
        %v2010 = vsel %vm2009, %v2001, %v2006
        %v2011 = vrsqrt.pop %v1997
        %v2012 = vmul.f32 %v2011, %v1997
        %v2013 = vmul.f32 %v2012, %v2011
        %v2014 = vmul.f32 0.5, %v2013
        %v2015 = vsub.f32 1.5, %v2014
        %v2016 = vmul.f32 %v2011, %v2015
        %vm2017 = vweird.f32 %v1997
        %vm2018 = vweird.f32 %v2011
        %vm2019 = vmor %vm2017, %vm2018
        %v2020 = vsel %vm2019, %v2011, %v2016
        %v2021 = vrsqrt.pop %v1998
        %v2022 = vmul.f32 %v2021, %v1998
        %v2023 = vmul.f32 %v2022, %v2021
        %v2024 = vmul.f32 0.5, %v2023
        %v2025 = vsub.f32 1.5, %v2024
        %v2026 = vmul.f32 %v2021, %v2025
        %vm2027 = vweird.f32 %v1998
        %vm2028 = vweird.f32 %v2021
        %vm2029 = vmor %vm2027, %vm2028
        %v2030 = vsel %vm2029, %v2021, %v2026
        %v2031 = vrsqrt.pop %v1999
        %v2032 = vmul.f32 %v2031, %v1999
        %v2033 = vmul.f32 %v2032, %v2031
        %v2034 = vmul.f32 0.5, %v2033
        %v2035 = vsub.f32 1.5, %v2034
        %v2036 = vmul.f32 %v2031, %v2035
        %vm2037 = vweird.f32 %v1999
        %vm2038 = vweird.f32 %v2031
        %vm2039 = vmor %vm2037, %vm2038
        %v2040 = vsel %vm2039, %v2031, %v2036
        %v2041 = vrsqrt.pop %v2000
        %v2042 = vmul.f32 %v2041, %v2000
        %v2043 = vmul.f32 %v2042, %v2041
        %v2044 = vmul.f32 0.5, %v2043
        %v2045 = vsub.f32 1.5, %v2044
        %v2046 = vmul.f32 %v2041, %v2045
        %vm2047 = vweird.f32 %v2000
        %vm2048 = vweird.f32 %v2041
        %vm2049 = vmor %vm2047, %vm2048
        %v2050 = vsel %vm2049, %v2041, %v2046
        %v2051 = vmul.f32 %v1966, %v2010
        %v2052 = vmul.f32 %v1967, %v2020
        %v2053 = vmul.f32 %v1968, %v2030
        %v2054 = vmul.f32 %v1969, %v2040
        %v2055 = vmul.f32 %v1970, %v2050
        %v2056 = vpack.c.bf16 %v2052, %v2051
        %v2057 = vpack.c.bf16 %v2054, %v2053
        %v2058 = vpack.c.bf16 %v2055, %v2055
        %v2059 = vld [vmem:[%s11] sm:$0xff]
        %v2060 = vld [vmem:[%s11 + $0x8] sm:$0xff]
        %v2061 = vld [vmem:[%s11 + $0x10] sm:$0xff]
        %v2062 = vld [vmem:[%s11 + $0x18] sm:$0xff]
        %v2063 = vld [vmem:[%s11 + $0x20] sm:$0xff]
        %v2064 = vld [vmem:[%s11 + $0x28] sm:$0xff]
        %v2065 = vld [vmem:[%s11 + $0x30] sm:$0xff]
        %v2066 = vld [vmem:[%s11 + $0x38] sm:$0xff]
        %v2067 = vld [vmem:[%s11 + $0x40] sm:$0xff]
        %v2068 = vld [vmem:[%s11 + $0x48] sm:$0xff]
        %v2069 = vld [vmem:[%s11 + $0x50] sm:$0xff]
        %v2070 = vld [vmem:[%s11 + $0x58] sm:$0xff]
        %v2071 = vld [vmem:[%s11 + $0x60] sm:$0xff]
        %v2072 = vld [vmem:[%s11 + $0x68] sm:$0xff]
        %v2073 = vld [vmem:[%s11 + $0x70] sm:$0xff]
        %v2074 = vld [vmem:[%s11 + $0x78] sm:$0xff]
        %v2091 = vunpack.c.l.b16 %v2059
        %v2092 = vunpack.c.h.b16 %v2059
        %v2093 = vunpack.c.l.b16 %v2060
        %v2094 = vunpack.c.h.b16 %v2060
        %v2095 = vunpack.c.l.b16 %v2061
        %v2096 = vunpack.c.h.b16 %v2061
        %v2097 = vunpack.c.l.b16 %v2062
        %v2098 = vunpack.c.h.b16 %v2062
        %v2099 = vunpack.c.l.b16 %v2063
        %v2100 = vunpack.c.h.b16 %v2063
        %v2101 = vunpack.c.l.b16 %v2064
        %v2102 = vunpack.c.h.b16 %v2064
        %v2103 = vunpack.c.l.b16 %v2065
        %v2104 = vunpack.c.h.b16 %v2065
        %v2105 = vunpack.c.l.b16 %v2066
        %v2106 = vunpack.c.h.b16 %v2066
        %v2107 = vunpack.c.l.b16 %v2067
        %v2108 = vunpack.c.h.b16 %v2067
        %v2109 = vunpack.c.l.b16 %v2068
        %v2110 = vunpack.c.h.b16 %v2068
        %v2111 = vunpack.c.l.b16 %v2069
        %v2112 = vunpack.c.h.b16 %v2069
        %v2113 = vunpack.c.l.b16 %v2070
        %v2114 = vunpack.c.h.b16 %v2070
        %v2115 = vunpack.c.l.b16 %v2071
        %v2116 = vunpack.c.h.b16 %v2071
        %v2117 = vunpack.c.l.b16 %v2072
        %v2118 = vunpack.c.h.b16 %v2072
        %v2119 = vunpack.c.l.b16 %v2073
        %v2120 = vunpack.c.h.b16 %v2073
        %v2121 = vunpack.c.l.b16 %v2074
        %v2122 = vunpack.c.h.b16 %v2074
        %v2123 = vpack.c.b16 %v2093, %v2091
        %v2124 = vpack.c.b16 %v2094, %v2092
        %v2125 = vpack.c.b16 %v2097, %v2095
        %v2126 = vpack.c.b16 %v2098, %v2096
        %v2127 = vpack.c.b16 %v2101, %v2099
        %v2128 = vpack.c.b16 %v2102, %v2100
        %v2129 = vpack.c.b16 %v2105, %v2103
        %v2130 = vpack.c.b16 %v2106, %v2104
        %v2131 = vpack.c.b16 %v2109, %v2107
        %v2132 = vpack.c.b16 %v2110, %v2108
        %v2133 = vpack.c.b16 %v2113, %v2111
        %v2134 = vpack.c.b16 %v2114, %v2112
        %v2135 = vpack.c.b16 %v2117, %v2115
        %v2136 = vpack.c.b16 %v2118, %v2116
        %v2137 = vpack.c.b16 %v2121, %v2119
        %v2138 = vpack.c.b16 %v2122, %v2120
        %2155 = vmatpush.bf16.msra.mxu0 %v2137
        %2156 = vmatpush.bf16.msra.mxu0 %v2135
        %2157 = vmatpush.bf16.msra.mxu0 %v2133
        %2158 = vmatpush.bf16.msra.mxu0 %v2131
        %2159 = vmatpush.bf16.msra.mxu0 %v2129
        %2160 = vmatpush.bf16.msra.mxu0 %v2127
        %2161 = vmatpush.bf16.msra.mxu0 %v2125
        %2162 = vmatpush.bf16.msra.mxu0 %v2123
        %2163 = vmatmul.bf16.gmra.mxu0 %v2056
        %v2164 = vpop.f32.mrf.mxu0
        %v2165 = vadd.f32 0.0, %v2164
        %v2166 = vpop.f32.mrf.mxu0
        %v2167 = vadd.f32 0.0, %v2166
        %2168 = vmatmul.bf16.gmra.mxu0 %v2057
        %v2169 = vpop.f32.mrf.mxu0
        %v2170 = vadd.f32 0.0, %v2169
        %v2171 = vpop.f32.mrf.mxu0
        %v2172 = vadd.f32 0.0, %v2171
        %2173 = vmatmul.bf16.gmra.mxu0 %v2058
        %v2174 = vpop.f32.mrf.mxu0
        %v2175 = vadd.f32 0.0, %v2174
        %v2176 = vpop.f32.mrf.mxu0
        %2177 = vdwg.mxu0
        %2178 = vmatpush.bf16.msra.mxu0 %v2138
        %2179 = vmatpush.bf16.msra.mxu0 %v2136
        %2180 = vmatpush.bf16.msra.mxu0 %v2134
        %2181 = vmatpush.bf16.msra.mxu0 %v2132
        %2182 = vmatpush.bf16.msra.mxu0 %v2130
        %2183 = vmatpush.bf16.msra.mxu0 %v2128
        %2184 = vmatpush.bf16.msra.mxu0 %v2126
        %2185 = vmatpush.bf16.msra.mxu0 %v2124
        %2186 = vmatmul.bf16.gmra.mxu0 %v2056
        %v2187 = vpop.f32.mrf.mxu0
        %v2188 = vadd.f32 0.0, %v2187
        %v2189 = vpop.f32.mrf.mxu0
        %v2190 = vadd.f32 0.0, %v2189
        %2191 = vmatmul.bf16.gmra.mxu0 %v2057
        %v2192 = vpop.f32.mrf.mxu0
        %v2193 = vadd.f32 0.0, %v2192
        %v2194 = vpop.f32.mrf.mxu0
        %v2195 = vadd.f32 0.0, %v2194
        %2196 = vmatmul.bf16.gmra.mxu0 %v2058
        %v2197 = vpop.f32.mrf.mxu0
        %v2198 = vadd.f32 0.0, %v2197
        %v2199 = vpop.f32.mrf.mxu0
        %2200 = vdwg.mxu0
        %2201 = vst [vmem:[%s555] sm:$0xff] %v2165
        %2202 = vst [vmem:[%s555 + $0x8] sm:$0xff] %v2188
        %2203 = vst [vmem:[%s555 + $0x10] sm:$0xff] %v2167
        %2204 = vst [vmem:[%s555 + $0x18] sm:$0xff] %v2190
        %2205 = vst [vmem:[%s555 + $0x20] sm:$0xff] %v2170
        %2206 = vst [vmem:[%s555 + $0x28] sm:$0xff] %v2193
        %2207 = vst [vmem:[%s555 + $0x30] sm:$0xff] %v2172
        %2208 = vst [vmem:[%s555 + $0x38] sm:$0xff] %v2195
        %2209 = vst [vmem:[%s555 + $0x40] sm:$0xff] %v2175
        %2210 = vst [vmem:[%s555 + $0x48] sm:$0xff] %v2198
        %s2211 = sand.u32 %s328, 1
        %s2212 = scalar_lea.sflag [#allocation3], %s2211
        %s2213 = sand.u32 %s328, 1
        %s2214 = smul.addr %s2213, 32
        %s2215 = scalar_lea.vmem [#allocation2], %s2214
        %s2216 = sand.u32 %s37, 1
        %s2217 = scalar_lea.sflag [#allocation5], %s2216
        %s2218 = sand.u32 %s354, 1
        %s2219 = smul.addr %s2218, 40
        %s2220 = scalar_lea.vmem [#allocation4], %s2219
        %s2221 = sand.u32 %s37, 1
        %s2222 = scalar_lea.sflag [#allocation5], %s2221
        %s2223 = sand.u32 %s380, 1
        %s2224 = smul.addr %s2223, 40
        %s2225 = scalar_lea.vmem [#allocation6], %s2224
        %s2226 = sand.u32 %s406, 1
        %s2227 = scalar_lea.sflag [#allocation8], %s2226
        %s2228 = sand.u32 %s406, 1
        %s2229 = smul.addr %s2228, 80
        %s2230 = scalar_lea.vmem [#allocation7], %s2229
        // Predicated region
        $region73: #{mavln_forward.1} parent=71 // pred_check
          %p2231 = pneg %p338
        $region74: #{mavln_forward.1} parent=71 // pred_check_branch
          %2233 = sbr.rel (%p2231) target = $region76
        $region75: #{mavln_forward.1} parent=71 // pred_region
          %2235 = vsyncadd %s2212, 0
          %s2236 = smul.addr %s37, 4
          %s2237 = smul.addr %s2236, 8
          %s2238 = scalar_lea.hbm %s13, %s2237
          %s2239 = sshll.u32 %s2215, 4
          %s2240 = int_to_ptr.vmem [resolvable:$true] %s2239
          %s2241 = sshll.u32 %s2238, 4
          %s2242 = int_to_ptr.hbm [resolvable:$true] %s2241
          %2247 = dma.vmem_to_hbm [thread:$0]  %s2240, 512, %s2242, %s2212, 128, 128, 8
        $region76: #{mavln_forward.1} parent=71 // pred_fallthru
          _
        // Predicated region
        $region77: #{mavln_forward.1} parent=71 // pred_check
          %p2248 = pneg %p364
        $region78: #{mavln_forward.1} parent=71 // pred_check_branch
          %2250 = sbr.rel (%p2248) target = $region80
        $region79: #{mavln_forward.1} parent=71 // pred_region
          %2252 = vsyncadd %s2217, 0
          %s2253 = smul.addr %s37, 5
          %s2254 = smul.addr %s2253, 8
          %s2255 = scalar_lea.hbm %s14, %s2254
          %s2256 = sshll.u32 %s2220, 4
          %s2257 = int_to_ptr.vmem [resolvable:$true] %s2256
          %s2258 = sshll.u32 %s2255, 4
          %s2259 = int_to_ptr.hbm [resolvable:$true] %s2258
          %2264 = dma.vmem_to_hbm [thread:$0]  %s2257, 640, %s2259, %s2217, 128, 128, 8
        $region80: #{mavln_forward.1} parent=71 // pred_fallthru
          _
        // Predicated region
        $region81: #{mavln_forward.1} parent=71 // pred_check
          %p2265 = pneg %p390
        $region82: #{mavln_forward.1} parent=71 // pred_check_branch
          %2267 = sbr.rel (%p2265) target = $region84
        $region83: #{mavln_forward.1} parent=71 // pred_region
          %2269 = vsyncadd %s2222, 0
          %s2270 = smul.addr %s37, 5
          %s2271 = smul.addr %s2270, 8
          %s2272 = scalar_lea.hbm %s15, %s2271
          %s2273 = sshll.u32 %s2225, 4
          %s2274 = int_to_ptr.vmem [resolvable:$true] %s2273
          %s2275 = sshll.u32 %s2272, 4
          %s2276 = int_to_ptr.hbm [resolvable:$true] %s2275
          %2281 = dma.vmem_to_hbm [thread:$0]  %s2274, 640, %s2276, %s2222, 128, 128, 8
        $region84: #{mavln_forward.1} parent=71 // pred_fallthru
          _
        // Predicated region
        $region85: #{mavln_forward.1} parent=71 // pred_check
          %p2282 = pneg %p416
        $region86: #{mavln_forward.1} parent=71 // pred_check_branch
          %2284 = sbr.rel (%p2282) target = $region88
        $region87: #{mavln_forward.1} parent=71 // pred_region
          %2286 = vsyncadd %s2227, 0
          %s2287 = smul.addr %s37, 10
          %s2288 = smul.addr %s2287, 8
          %s2289 = scalar_lea.hbm %s16, %s2288
          %s2290 = sshll.u32 %s2230, 4
          %s2291 = int_to_ptr.vmem [resolvable:$true] %s2290
          %s2292 = sshll.u32 %s2289, 4
          %s2293 = int_to_ptr.hbm [resolvable:$true] %s2292
          %2298 = dma.vmem_to_hbm [thread:$0]  %s2291, 1280, %s2293, %s2227, 256, 256, 16
        $region88: #{mavln_forward.1} parent=71 // pred_fallthru
          _
      $region72: #{mavln_forward.1} parent=5 // pred_fallthru
        _
      %p2299 = scmp.le.s32.totalorder 2, %s32
      // Predicated region
      $region89: #{mavln_forward.1} parent=5 // pred_check
        %p2300 = pneg %p2299
      $region90: #{mavln_forward.1} parent=5 // pred_check_branch
        %2302 = sbr.rel (%p2300) target = $region92
      $region91: #{mavln_forward.1} parent=5 // pred_region
        %s2303 = ssub.s32 %s32, 2
        // Predicated region
        $region93: #{mavln_forward.1} parent=91 // pred_check
          %p2304 = pneg %p344
        $region94: #{mavln_forward.1} parent=91 // pred_check_branch
          %2306 = sbr.rel (%p2304) target = $region96
        $region95: #{mavln_forward.1} parent=91 // pred_region
          %s2307 = sand.u32 %s329, 1
          %s2308 = scalar_lea.sflag [#allocation3], %s2307
          %s2309 = sand.u32 %s329, 1
          %s2310 = smul.addr %s2309, 32
          %s2311 = scalar_lea.vmem [#allocation2], %s2310
          %2313 = dma.done %s2308, 512
        $region96: #{mavln_forward.1} parent=91 // pred_fallthru
          _
        // Predicated region
        $region97: #{mavln_forward.1} parent=91 // pred_check
          %p2314 = pneg %p370
        $region98: #{mavln_forward.1} parent=91 // pred_check_branch
          %2316 = sbr.rel (%p2314) target = $region100
        $region99: #{mavln_forward.1} parent=91 // pred_region
          %s2317 = sand.u32 %s38, 1
          %s2318 = scalar_lea.sflag [#allocation5], %s2317
          %s2319 = sand.u32 %s355, 1
          %s2320 = smul.addr %s2319, 40
          %s2321 = scalar_lea.vmem [#allocation4], %s2320
          %2323 = dma.done %s2318, 640
        $region100: #{mavln_forward.1} parent=91 // pred_fallthru
          _
        // Predicated region
        $region101: #{mavln_forward.1} parent=91 // pred_check
          %p2324 = pneg %p396
        $region102: #{mavln_forward.1} parent=91 // pred_check_branch
          %2326 = sbr.rel (%p2324) target = $region104
        $region103: #{mavln_forward.1} parent=91 // pred_region
          %s2327 = sand.u32 %s38, 1
          %s2328 = scalar_lea.sflag [#allocation5], %s2327
          %s2329 = sand.u32 %s381, 1
          %s2330 = smul.addr %s2329, 40
          %s2331 = scalar_lea.vmem [#allocation6], %s2330
          %2333 = dma.done %s2328, 640
        $region104: #{mavln_forward.1} parent=91 // pred_fallthru
          _
        // Predicated region
        $region105: #{mavln_forward.1} parent=91 // pred_check
          %p2334 = pneg %p422
        $region106: #{mavln_forward.1} parent=91 // pred_check_branch
          %2336 = sbr.rel (%p2334) target = $region108
        $region107: #{mavln_forward.1} parent=91 // pred_region
          %s2337 = sand.u32 %s407, 1
          %s2338 = scalar_lea.sflag [#allocation8], %s2337
          %s2339 = sand.u32 %s407, 1
          %s2340 = smul.addr %s2339, 80
          %s2341 = scalar_lea.vmem [#allocation7], %s2340
          %2343 = dma.done %s2338, 1280
        $region108: #{mavln_forward.1} parent=91 // pred_fallthru
          _
      $region92: #{mavln_forward.1} parent=5 // pred_fallthru
        _
    $region6: #{mavln_forward.1} parent=1 // loop_footer
      %s36 = sadd.s32 1, %s32
    $region7: #{mavln_forward.1} parent=1 // loop_footer_branch
      %31 = sbr.rel target = $region3
    $region8: #{mavln_forward.1} parent=1 // loop_exit
      _
    %2344 = vsyncpa [#allocation3], 1
    %s2345 = scalar_lea.sflag [#allocation3], 1
    %2346 = vsyncpa %s2345, 1
    %2347 = vsyncpa [#allocation5], 1
    %s2348 = scalar_lea.sflag [#allocation5], 1
    %2349 = vsyncpa %s2348, 1
    %2350 = vsyncpa [#allocation8], 1
    %s2351 = scalar_lea.sflag [#allocation8], 1
    %2352 = vsyncpa %s2351, 1

</llo_original>
